<compile_context>
chip_gen: v6e
topology: v6e:2x2x1
jax: 0.10.0
libtpu: 0.0.40
codegen_flags: <defaults>
</compile_context>

<pallas_src>
import functools
import math

import jax
import jax.numpy as jnp
from jax import lax
from jax.experimental import pallas as pl
from jax.experimental.pallas import tpu as pltpu

LRELU_SLOPE = 0.01   # PyTorch nn.LeakyReLU default negative_slope
LN_EPS = 1e-5        # PyTorch nn.LayerNorm default eps


def _layer_norm(x, gamma, beta):
    mu = jnp.mean(x, axis=-1, keepdims=True)
    var = jnp.mean((x - mu) ** 2, axis=-1, keepdims=True)
    return (x - mu) * lax.rsqrt(var + LN_EPS) * gamma + beta


def _lrelu(x):
    return jnp.where(x >= 0, x, LRELU_SLOPE * x)


def transformer_layer_kernel(
    xq_ref, xk_ref, xv_ref,
    wq_ref, bq_ref, wk_ref, bk_ref, wv_ref, bv_ref,   # packed QKV: (D, H*hd) / (1, H*hd)
    wo_ref, bo_ref,                                   # output proj: (H*hd, D) / (1, D)
    g1_ref, be1_ref,                                  # LayerNorm1 gamma/beta: (1, D)
    w1_ref, b1_ref, w2_ref, b2_ref,                   # feedforward: (D,F)/(1,F)/(F,D)/(1,D)
    g2_ref, be2_ref,                                  # LayerNorm2 gamma/beta: (1, D)
    out_ref,
    k_scratch, v_scratch,                             # persistent VMEM: (S, H*hd) compute dtype
    *, num_heads, head_dim,
):
    cdt = wq_ref.dtype            # compute dtype for MXU operands (bf16 by default)
    qi = pl.program_id(1)

    # ---- K/V projections: computed once per batch (q-tile axis is the inner grid loop,
    # marked "arbitrary"; the scratch persists across q-tiles of the same batch). --------
    @pl.when(qi == 0)
    def _():
        xk = xk_ref[0].astype(cdt)            # (S, D)
        xv = xv_ref[0].astype(cdt)            # (S, D)
        k_scratch[...] = (jnp.dot(xk, wk_ref[...], preferred_element_type=jnp.float32)
                          + bk_ref[...]).astype(cdt)
        v_scratch[...] = (jnp.dot(xv, wv_ref[...], preferred_element_type=jnp.float32)
                          + bv_ref[...]).astype(cdt)

    xq = xq_ref[0]                            # (TQ, D) input dtype (residual source)
    xq_c = xq.astype(cdt)

    # Fused lane-dense Q projection (softmax scale already folded into wq/bq by wrapper).
    q_all = (jnp.dot(xq_c, wq_ref[...], preferred_element_type=jnp.float32)
             + bq_ref[...]).astype(cdt)       # (TQ, H*hd)
    k_all = k_scratch[...]                    # (S, H*hd)
    v_all = v_scratch[...]                    # (S, H*hd)
    wo = wo_ref[...]                          # (H*hd, D)

    tq = q_all.shape[0]
    d_model = out_ref.shape[-1]

    # Per-head attention fused with the output projection: accumulate each head's PV
    # output against its wo row-block (sublane-aligned slice), so there is no lane-dim
    # concatenate and score tensors are consumed per iteration.
    attn = jnp.zeros((tq, d_model), jnp.float32)
    for h in range(num_heads):                              # static unroll over heads
        sl = slice(h * head_dim, (h + 1) * head_dim)
        q_h = q_all[:, sl]                                  # (TQ, hd)
        k_h = k_all[:, sl]                                  # (S,  hd)
        v_h = v_all[:, sl]                                  # (S,  hd)
        # q_h @ k_h^T without materializing a transpose: contract last dims of both.
        s = lax.dot_general(q_h, k_h, (((1,), (1,)), ((), ())),
                            preferred_element_type=jnp.float32)         # (TQ, S) f32
        s = s - jnp.max(s, axis=-1, keepdims=True)
        p = jnp.exp(s)                                                  # unnormalized
        denom = jnp.sum(p, axis=-1, keepdims=True)                      # (TQ, 1)
        o_h = jnp.dot(p.astype(cdt), v_h,
                      preferred_element_type=jnp.float32)               # (TQ, hd)
        # Normalize AFTER the PV matmul: O(TQ*hd) multiply; reciprocal on the EUP slot.
        o_h = o_h * pl.reciprocal(denom, approx=True)
        attn = attn + jnp.dot(o_h.astype(cdt), wo[sl, :],
                              preferred_element_type=jnp.float32)       # (TQ, D)

    x = attn + bo_ref[...] + xq.astype(jnp.float32)         # f32 residual stream
    x = _layer_norm(x, g1_ref[...], be1_ref[...])

    # Feedforward: LeakyReLU after BOTH linear layers (matches the PyTorch stack).
    h1 = _lrelu(jnp.dot(x.astype(cdt), w1_ref[...],
                        preferred_element_type=jnp.float32) + b1_ref[...])
    h2 = _lrelu(jnp.dot(h1.astype(cdt), w2_ref[...],
                        preferred_element_type=jnp.float32) + b2_ref[...])
    x = h2 + x
    x = _layer_norm(x, g2_ref[...], be2_ref[...])
    out_ref[0] = x.astype(out_ref.dtype)


def _choose_q_tile(S, cap=512):
    """Largest query-row tile <= cap dividing S, preferring multiples of 256
    (MXU pass granularity on v6e/v7x), then 128, then 8."""
    if S <= cap:
        return S
    for step in (256, 128, 8):
        t = (cap // step) * step
        while t >= step:
            if S % t == 0:
                return t
            t -= step
    return S


def _default_vmem_limit_bytes():
    """~75% of the chip's physical VMEM, capped at 96 MiB.
    -> ~96 MiB on v5e/v6e (128 MiB physical), ~48 MiB on v7x (64 MiB physical)."""
    try:
        cap = int(pltpu.get_tpu_info().vmem_capacity_bytes)
    except Exception:
        cap = 64 * 1024 * 1024
    return min(96 * 1024 * 1024, (cap * 3) // 4)


def transformer_layer(query, key, value, params, *, num_head, head_dim,
                      q_tile_cap=512, compute_dtype=jnp.bfloat16):
    B, S, D = query.shape
    HD = num_head * head_dim
    assert params["wq"].shape == (D, HD)
    tq = _choose_q_tile(S, q_tile_cap)
    nq = S // tq

    scale = 1.0 / math.sqrt(head_dim)
    # Fold the softmax scale into the Q projection at trace time (zero runtime cost) and
    # cast matmul weights to the compute dtype (bf16 default -> full-rate MXU, half the
    # weight DMA / VMEM).  Biases and LayerNorm params stay f32.
    weight_arrays = (
        (params["wq"] * scale).astype(compute_dtype),
        (params["bq"] * scale).astype(jnp.float32),
        params["wk"].astype(compute_dtype), params["bk"].astype(jnp.float32),
        params["wv"].astype(compute_dtype), params["bv"].astype(jnp.float32),
        params["wo"].astype(compute_dtype), params["bo"].astype(jnp.float32),
        params["g1"].astype(jnp.float32), params["be1"].astype(jnp.float32),
        params["w1"].astype(compute_dtype), params["b1"].astype(jnp.float32),
        params["w2"].astype(compute_dtype), params["b2"].astype(jnp.float32),
        params["g2"].astype(jnp.float32), params["be2"].astype(jnp.float32),
    )

    def const_spec(w):
        zeros = (0,) * w.ndim
        # Constant block index: weights are only DMA'd when the block changes (i.e. once).
        return pl.BlockSpec(w.shape, lambda b, qi, _z=zeros: _z)

    in_specs = [
        pl.BlockSpec((1, tq, D), lambda b, qi: (b, qi, 0)),   # query (tiled over rows)
        pl.BlockSpec((1, S, D), lambda b, qi: (b, 0, 0)),     # key   (full sequence)
        pl.BlockSpec((1, S, D), lambda b, qi: (b, 0, 0)),     # value (full sequence)
    ] + [const_spec(w) for w in weight_arrays]

    kernel = functools.partial(
        transformer_layer_kernel, num_heads=num_head, head_dim=head_dim)

    return pl.pallas_call(
        kernel,
        out_shape=jax.ShapeDtypeStruct((B, S, D), query.dtype),
        grid_spec=pltpu.PrefetchScalarGridSpec(
            num_scalar_prefetch=0,
            grid=(B, nq),
            in_specs=in_specs,
            out_specs=pl.BlockSpec((1, tq, D), lambda b, qi: (b, qi, 0)),
            scratch_shapes=[
                pltpu.VMEM((S, HD), compute_dtype),   # cached K projection (per batch)
                pltpu.VMEM((S, HD), compute_dtype),   # cached V projection (per batch)
            ],
        ),
        compiler_params=pltpu.CompilerParams(
            # K/V are cached across the q-tile axis -> that axis must be sequential
            # ("arbitrary"); megacore parallelism is kept via the "parallel" batch axis.
            dimension_semantics=("parallel", "arbitrary"),
            vmem_limit_bytes=_default_vmem_limit_bytes(),
        ),
    )(query, key, value, *weight_arrays)


def reference(query, key, value, params, *, num_head, head_dim):
    """Pure-JAX (f32) reference mirroring the PyTorch forward (packed-weight layout)."""
    B, S, D = query.shape
    q = query @ params["wq"] + params["bq"][0]
    k = key @ params["wk"] + params["bk"][0]
    v = value @ params["wv"] + params["bv"][0]
    q = q.reshape(B, S, num_head, head_dim)
    k = k.reshape(B, S, num_head, head_dim)
    v = v.reshape(B, S, num_head, head_dim)
    s = jnp.einsum("bqhd,bkhd->bhqk", q, k) / math.sqrt(head_dim)
    p = jax.nn.softmax(s, axis=-1)
    o = jnp.einsum("bhqk,bkhd->bqhd", p, v).reshape(B, S, num_head * head_dim)
    x = o @ params["wo"] + params["bo"][0] + query
    x = _layer_norm(x, params["g1"][0], params["be1"][0])
    h1 = _lrelu(x @ params["w1"] + params["b1"][0])
    h2 = _lrelu(h1 @ params["w2"] + params["b2"][0])
    x = h2 + x
    x = _layer_norm(x, params["g2"][0], params["be2"][0])
    return x


def init_params(key, latent_dim, head_dim, num_head, ff_hidden_dim):
    ks = jax.random.split(key, 16)
    s = 0.1
    HD = num_head * head_dim
    return {
        # Packed per-head QKV: columns h*head_dim:(h+1)*head_dim belong to head h.
        "wq": s * jax.random.normal(ks[0], (latent_dim, HD), jnp.float32),
        "bq": s * jax.random.normal(ks[1], (1, HD), jnp.float32),
        "wk": s * jax.random.normal(ks[2], (latent_dim, HD), jnp.float32),
        "bk": s * jax.random.normal(ks[3], (1, HD), jnp.float32),
        "wv": s * jax.random.normal(ks[4], (latent_dim, HD), jnp.float32),
        "bv": s * jax.random.normal(ks[5], (1, HD), jnp.float32),
        "wo": s * jax.random.normal(ks[6], (HD, latent_dim), jnp.float32),
        "bo": s * jax.random.normal(ks[7], (1, latent_dim), jnp.float32),
        "g1": 1.0 + s * jax.random.normal(ks[8], (1, latent_dim), jnp.float32),
        "be1": s * jax.random.normal(ks[9], (1, latent_dim), jnp.float32),
        "w1": s * jax.random.normal(ks[10], (latent_dim, ff_hidden_dim), jnp.float32),
        "b1": s * jax.random.normal(ks[11], (1, ff_hidden_dim), jnp.float32),
        "w2": s * jax.random.normal(ks[12], (ff_hidden_dim, latent_dim), jnp.float32),
        "b2": s * jax.random.normal(ks[13], (1, latent_dim), jnp.float32),
        "g2": 1.0 + s * jax.random.normal(ks[14], (1, latent_dim), jnp.float32),
        "be2": s * jax.random.normal(ks[15], (1, latent_dim), jnp.float32),
    }


if __name__ == "__main__":
    B, S = 2, 8
    latent_dim, head_dim, num_head, ff_hidden_dim = 32, 16, 2, 128

    root = jax.random.PRNGKey(0)
    kq, kk, kv, kp = jax.random.split(root, 4)
    query = jax.random.normal(kq, (B, S, latent_dim), jnp.float32)
    key = jax.random.normal(kk, (B, S, latent_dim), jnp.float32)
    value = jax.random.normal(kv, (B, S, latent_dim), jnp.float32)
    params = init_params(kp, latent_dim, head_dim, num_head, ff_hidden_dim)

    ref = reference(query, key, value, params, num_head=num_head, head_dim=head_dim)

    # f32 compute path: strict check (only deviation is the EUP approximate reciprocal).
    out_f32 = transformer_layer(query, key, value, params, num_head=num_head,
                                head_dim=head_dim, compute_dtype=jnp.float32)
    out_f32 = jax.block_until_ready(out_f32)
    assert out_f32.shape == (B, S, latent_dim)
    assert jnp.allclose(out_f32, ref, rtol=2e-3, atol=2e-3), "f32 kernel mismatch vs reference"

    # Default bf16 compute path (full-rate MXU, f32 accumulation): looser tolerance for
    # bf16-quantized matmul operands.
    out_bf16 = transformer_layer(query, key, value, params,
                                 num_head=num_head, head_dim=head_dim)
    out_bf16 = jax.block_until_ready(out_bf16)
    assert out_bf16.shape == (B, S, latent_dim)
    assert jnp.allclose(out_bf16, ref, rtol=5e-2, atol=5e-2), "bf16 kernel mismatch vs reference"

    print("KERNEL_OK")
</pallas_src>

<mosaic_0001>
module attributes {stable_mosaic.version = 11 : i64} {
  func.func @transformer_layer_kernel(%arg0: i32, %arg1: i32, %arg2: memref<1x8x32xf32, #tpu.memory_space<vmem>>, %arg3: memref<1x8x32xf32, #tpu.memory_space<vmem>>, %arg4: memref<1x8x32xf32, #tpu.memory_space<vmem>>, %arg5: memref<32x32xf32, #tpu.memory_space<vmem>>, %arg6: memref<1x32xf32, #tpu.memory_space<vmem>>, %arg7: memref<32x32xf32, #tpu.memory_space<vmem>>, %arg8: memref<1x32xf32, #tpu.memory_space<vmem>>, %arg9: memref<32x32xf32, #tpu.memory_space<vmem>>, %arg10: memref<1x32xf32, #tpu.memory_space<vmem>>, %arg11: memref<32x32xf32, #tpu.memory_space<vmem>>, %arg12: memref<1x32xf32, #tpu.memory_space<vmem>>, %arg13: memref<1x32xf32, #tpu.memory_space<vmem>>, %arg14: memref<1x32xf32, #tpu.memory_space<vmem>>, %arg15: memref<32x128xf32, #tpu.memory_space<vmem>>, %arg16: memref<1x128xf32, #tpu.memory_space<vmem>>, %arg17: memref<128x32xf32, #tpu.memory_space<vmem>>, %arg18: memref<1x32xf32, #tpu.memory_space<vmem>>, %arg19: memref<1x32xf32, #tpu.memory_space<vmem>>, %arg20: memref<1x32xf32, #tpu.memory_space<vmem>>, %arg21: memref<1x8x32xf32, #tpu.memory_space<vmem>>, %arg22: memref<8x32xf32, #tpu.memory_space<vmem>>, %arg23: memref<8x32xf32, #tpu.memory_space<vmem>>) attributes {dimension_semantics = [#tpu.dimension_semantics<parallel>, #tpu.dimension_semantics<arbitrary>], iteration_bounds = array<i64: 2, 1>, scalar_prefetch = 0 : i64, scratch_operands = 2 : i64, tpu.core_type = #tpu.core_type<tc>, window_params = [{transform_indices = @transform_0, window_bounds = array<i64: 1, 8, 32>}, {transform_indices = @transform_1, window_bounds = array<i64: 1, 8, 32>}, {transform_indices = @transform_2, window_bounds = array<i64: 1, 8, 32>}, {pipeline_mode = #tpu.pipeline_mode<synchronous>, transform_indices = @transform_3, window_bounds = array<i64: 32, 32>}, {pipeline_mode = #tpu.pipeline_mode<synchronous>, transform_indices = @transform_4, window_bounds = array<i64: 1, 32>}, {pipeline_mode = #tpu.pipeline_mode<synchronous>, transform_indices = @transform_5, window_bounds = array<i64: 32, 32>}, {pipeline_mode = #tpu.pipeline_mode<synchronous>, transform_indices = @transform_6, window_bounds = array<i64: 1, 32>}, {pipeline_mode = #tpu.pipeline_mode<synchronous>, transform_indices = @transform_7, window_bounds = array<i64: 32, 32>}, {pipeline_mode = #tpu.pipeline_mode<synchronous>, transform_indices = @transform_8, window_bounds = array<i64: 1, 32>}, {pipeline_mode = #tpu.pipeline_mode<synchronous>, transform_indices = @transform_9, window_bounds = array<i64: 32, 32>}, {pipeline_mode = #tpu.pipeline_mode<synchronous>, transform_indices = @transform_10, window_bounds = array<i64: 1, 32>}, {pipeline_mode = #tpu.pipeline_mode<synchronous>, transform_indices = @transform_11, window_bounds = array<i64: 1, 32>}, {pipeline_mode = #tpu.pipeline_mode<synchronous>, transform_indices = @transform_12, window_bounds = array<i64: 1, 32>}, {pipeline_mode = #tpu.pipeline_mode<synchronous>, transform_indices = @transform_13, window_bounds = array<i64: 32, 128>}, {pipeline_mode = #tpu.pipeline_mode<synchronous>, transform_indices = @transform_14, window_bounds = array<i64: 1, 128>}, {pipeline_mode = #tpu.pipeline_mode<synchronous>, transform_indices = @transform_15, window_bounds = array<i64: 128, 32>}, {pipeline_mode = #tpu.pipeline_mode<synchronous>, transform_indices = @transform_16, window_bounds = array<i64: 1, 32>}, {pipeline_mode = #tpu.pipeline_mode<synchronous>, transform_indices = @transform_17, window_bounds = array<i64: 1, 32>}, {pipeline_mode = #tpu.pipeline_mode<synchronous>, transform_indices = @transform_18, window_bounds = array<i64: 1, 32>}, {transform_indices = @transform_19, window_bounds = array<i64: 1, 8, 32>}]} {
    %c0_i32 = arith.constant 0 : i32
    %0 = arith.cmpi eq, %arg1, %c0_i32 : i32
    %1 = arith.extui %0 : i1 to i32
    %c0_i32_0 = arith.constant 0 : i32
    %2 = arith.cmpi ne, %1, %c0_i32_0 : i32
    scf.if %2 {
      %c0_61 = arith.constant 0 : index
      %c0_62 = arith.constant 0 : index
      %c0_63 = arith.constant 0 : index
      %126 = vector.load %arg3[%c0_61, %c0_62, %c0_63] : memref<1x8x32xf32, #tpu.memory_space<vmem>>, vector<1x8x32xf32>
      %127 = vector.shape_cast %126 : vector<1x8x32xf32> to vector<8x32xf32>
      %c0_64 = arith.constant 0 : index
      %c0_65 = arith.constant 0 : index
      %c0_66 = arith.constant 0 : index
      %128 = vector.load %arg4[%c0_64, %c0_65, %c0_66] : memref<1x8x32xf32, #tpu.memory_space<vmem>>, vector<1x8x32xf32>
      %129 = vector.shape_cast %128 : vector<1x8x32xf32> to vector<8x32xf32>
      %c0_67 = arith.constant 0 : index
      %c0_68 = arith.constant 0 : index
      %130 = vector.load %arg7[%c0_67, %c0_68] : memref<32x32xf32, #tpu.memory_space<vmem>>, vector<32x32xf32>
      %cst_69 = arith.constant dense<0.000000e+00> : vector<8x32xf32>
      %131 = tpu.matmul %127, %130, %cst_69 {dimension_numbers = #tpu.dot_dimension_numbers<[1], [0], [0], [1], [0, 0, 1, 1], [], []>} : vector<8x32xf32>, vector<32x32xf32>, vector<8x32xf32> -> vector<8x32xf32>
      %c0_70 = arith.constant 0 : index
      %c0_71 = arith.constant 0 : index
      %132 = vector.load %arg8[%c0_70, %c0_71] : memref<1x32xf32, #tpu.memory_space<vmem>>, vector<1x32xf32>
      %133 = vector.broadcast %132 : vector<1x32xf32> to vector<8x32xf32>
      %134 = arith.addf %131, %133 : vector<8x32xf32>
      %c0_72 = arith.constant 0 : index
      %c0_73 = arith.constant 0 : index
      %135 = vector.load %arg22[%c0_72, %c0_73] : memref<8x32xf32, #tpu.memory_space<vmem>>, vector<8x32xf32>
      tpu.vector_store %arg22[%c0_72, %c0_73], %134 {strides = array<i32>} : memref<8x32xf32, #tpu.memory_space<vmem>>, vector<8x32xf32>,
      %c0_74 = arith.constant 0 : index
      %c0_75 = arith.constant 0 : index
      %136 = vector.load %arg9[%c0_74, %c0_75] : memref<32x32xf32, #tpu.memory_space<vmem>>, vector<32x32xf32>
      %cst_76 = arith.constant dense<0.000000e+00> : vector<8x32xf32>
      %137 = tpu.matmul %129, %136, %cst_76 {dimension_numbers = #tpu.dot_dimension_numbers<[1], [0], [0], [1], [0, 0, 1, 1], [], []>} : vector<8x32xf32>, vector<32x32xf32>, vector<8x32xf32> -> vector<8x32xf32>
      %c0_77 = arith.constant 0 : index
      %c0_78 = arith.constant 0 : index
      %138 = vector.load %arg10[%c0_77, %c0_78] : memref<1x32xf32, #tpu.memory_space<vmem>>, vector<1x32xf32>
      %139 = vector.broadcast %138 : vector<1x32xf32> to vector<8x32xf32>
      %140 = arith.addf %137, %139 : vector<8x32xf32>
      %c0_79 = arith.constant 0 : index
      %c0_80 = arith.constant 0 : index
      %141 = vector.load %arg23[%c0_79, %c0_80] : memref<8x32xf32, #tpu.memory_space<vmem>>, vector<8x32xf32>
      tpu.vector_store %arg23[%c0_79, %c0_80], %140 {strides = array<i32>} : memref<8x32xf32, #tpu.memory_space<vmem>>, vector<8x32xf32>,
    } else {
    }
    %c0 = arith.constant 0 : index
    %c0_1 = arith.constant 0 : index
    %c0_2 = arith.constant 0 : index
    %3 = vector.load %arg2[%c0, %c0_1, %c0_2] : memref<1x8x32xf32, #tpu.memory_space<vmem>>, vector<1x8x32xf32>
    %4 = vector.shape_cast %3 : vector<1x8x32xf32> to vector<8x32xf32>
    %c0_3 = arith.constant 0 : index
    %c0_4 = arith.constant 0 : index
    %5 = vector.load %arg5[%c0_3, %c0_4] : memref<32x32xf32, #tpu.memory_space<vmem>>, vector<32x32xf32>
    %cst = arith.constant dense<0.000000e+00> : vector<8x32xf32>
    %6 = tpu.matmul %4, %5, %cst {dimension_numbers = #tpu.dot_dimension_numbers<[1], [0], [0], [1], [0, 0, 1, 1], [], []>} : vector<8x32xf32>, vector<32x32xf32>, vector<8x32xf32> -> vector<8x32xf32>
    %c0_5 = arith.constant 0 : index
    %c0_6 = arith.constant 0 : index
    %7 = vector.load %arg6[%c0_5, %c0_6] : memref<1x32xf32, #tpu.memory_space<vmem>>, vector<1x32xf32>
    %8 = vector.broadcast %7 : vector<1x32xf32> to vector<8x32xf32>
    %9 = arith.addf %6, %8 : vector<8x32xf32>
    %c0_7 = arith.constant 0 : index
    %c0_8 = arith.constant 0 : index
    %10 = vector.load %arg22[%c0_7, %c0_8] : memref<8x32xf32, #tpu.memory_space<vmem>>, vector<8x32xf32>
    %c0_9 = arith.constant 0 : index
    %c0_10 = arith.constant 0 : index
    %11 = vector.load %arg23[%c0_9, %c0_10] : memref<8x32xf32, #tpu.memory_space<vmem>>, vector<8x32xf32>
    %c0_11 = arith.constant 0 : index
    %c0_12 = arith.constant 0 : index
    %12 = vector.load %arg11[%c0_11, %c0_12] : memref<32x32xf32, #tpu.memory_space<vmem>>, vector<32x32xf32>
    %cst_13 = arith.constant 0.000000e+00 : f32
    %13 = vector.broadcast %cst_13 : f32 to vector<8x32xf32>
    %14 = vector.extract_strided_slice %9 {offsets = [0, 0], sizes = [8, 16], strides = [1, 1]} : vector<8x32xf32> to vector<8x16xf32>
    %15 = vector.extract_strided_slice %10 {offsets = [0, 0], sizes = [8, 16], strides = [1, 1]} : vector<8x32xf32> to vector<8x16xf32>
    %16 = vector.extract_strided_slice %11 {offsets = [0, 0], sizes = [8, 16], strides = [1, 1]} : vector<8x32xf32> to vector<8x16xf32>
    %cst_14 = arith.constant dense<0.000000e+00> : vector<8x8xf32>
    %17 = tpu.matmul %14, %15, %cst_14 {dimension_numbers = #tpu.dot_dimension_numbers<[1], [1], [0], [0], [0, 0, 1, 0], [], []>} : vector<8x16xf32>, vector<8x16xf32>, vector<8x8xf32> -> vector<8x8xf32>
    %cst_15 = arith.constant dense<0xFF800000> : vector<8xf32>
    %18 = vector.multi_reduction <maximumf>, %17, %cst_15 [1] : vector<8x8xf32> to vector<8xf32>
    %19 = vector.shape_cast %18 : vector<8xf32> to vector<8x1xf32>
    %20 = vector.broadcast %19 : vector<8x1xf32> to vector<8x8xf32>
    %21 = arith.subf %17, %20 : vector<8x8xf32>
    %22 = math.exp %21 : vector<8x8xf32>
    %cst_16 = arith.constant dense<0.000000e+00> : vector<8xf32>
    %23 = vector.multi_reduction <add>, %22, %cst_16 [1] : vector<8x8xf32> to vector<8xf32>
    %24 = vector.shape_cast %23 : vector<8xf32> to vector<8x1xf32>
    %cst_17 = arith.constant dense<0.000000e+00> : vector<8x16xf32>
    %25 = tpu.matmul %22, %16, %cst_17 {dimension_numbers = #tpu.dot_dimension_numbers<[1], [0], [0], [1], [0, 0, 1, 1], [], []>} : vector<8x8xf32>, vector<8x16xf32>, vector<8x16xf32> -> vector<8x16xf32>
    %26 = tpu.reciprocal %24 {approx = true} : vector<8x1xf32> -> vector<8x1xf32>
    %27 = vector.broadcast %26 : vector<8x1xf32> to vector<8x16xf32>
    %28 = arith.mulf %25, %27 : vector<8x16xf32>
    %29 = vector.extract_strided_slice %12 {offsets = [0, 0], sizes = [16, 32], strides = [1, 1]} : vector<32x32xf32> to vector<16x32xf32>
    %cst_18 = arith.constant dense<0.000000e+00> : vector<8x32xf32>
    %30 = tpu.matmul %28, %29, %cst_18 {dimension_numbers = #tpu.dot_dimension_numbers<[1], [0], [0], [1], [0, 0, 1, 1], [], []>} : vector<8x16xf32>, vector<16x32xf32>, vector<8x32xf32> -> vector<8x32xf32>
    %31 = arith.addf %13, %30 : vector<8x32xf32>
    %32 = vector.extract_strided_slice %9 {offsets = [0, 16], sizes = [8, 16], strides = [1, 1]} : vector<8x32xf32> to vector<8x16xf32>
    %33 = vector.extract_strided_slice %10 {offsets = [0, 16], sizes = [8, 16], strides = [1, 1]} : vector<8x32xf32> to vector<8x16xf32>
    %34 = vector.extract_strided_slice %11 {offsets = [0, 16], sizes = [8, 16], strides = [1, 1]} : vector<8x32xf32> to vector<8x16xf32>
    %cst_19 = arith.constant dense<0.000000e+00> : vector<8x8xf32>
    %35 = tpu.matmul %32, %33, %cst_19 {dimension_numbers = #tpu.dot_dimension_numbers<[1], [1], [0], [0], [0, 0, 1, 0], [], []>} : vector<8x16xf32>, vector<8x16xf32>, vector<8x8xf32> -> vector<8x8xf32>
    %cst_20 = arith.constant dense<0xFF800000> : vector<8xf32>
    %36 = vector.multi_reduction <maximumf>, %35, %cst_20 [1] : vector<8x8xf32> to vector<8xf32>
    %37 = vector.shape_cast %36 : vector<8xf32> to vector<8x1xf32>
    %38 = vector.broadcast %37 : vector<8x1xf32> to vector<8x8xf32>
    %39 = arith.subf %35, %38 : vector<8x8xf32>
    %40 = math.exp %39 : vector<8x8xf32>
    %cst_21 = arith.constant dense<0.000000e+00> : vector<8xf32>
    %41 = vector.multi_reduction <add>, %40, %cst_21 [1] : vector<8x8xf32> to vector<8xf32>
    %42 = vector.shape_cast %41 : vector<8xf32> to vector<8x1xf32>
    %cst_22 = arith.constant dense<0.000000e+00> : vector<8x16xf32>
    %43 = tpu.matmul %40, %34, %cst_22 {dimension_numbers = #tpu.dot_dimension_numbers<[1], [0], [0], [1], [0, 0, 1, 1], [], []>} : vector<8x8xf32>, vector<8x16xf32>, vector<8x16xf32> -> vector<8x16xf32>
    %44 = tpu.reciprocal %42 {approx = true} : vector<8x1xf32> -> vector<8x1xf32>
    %45 = vector.broadcast %44 : vector<8x1xf32> to vector<8x16xf32>
    %46 = arith.mulf %43, %45 : vector<8x16xf32>
    %47 = vector.extract_strided_slice %12 {offsets = [16, 0], sizes = [16, 32], strides = [1, 1]} : vector<32x32xf32> to vector<16x32xf32>
    %cst_23 = arith.constant dense<0.000000e+00> : vector<8x32xf32>
    %48 = tpu.matmul %46, %47, %cst_23 {dimension_numbers = #tpu.dot_dimension_numbers<[1], [0], [0], [1], [0, 0, 1, 1], [], []>} : vector<8x16xf32>, vector<16x32xf32>, vector<8x32xf32> -> vector<8x32xf32>
    %49 = arith.addf %31, %48 : vector<8x32xf32>
    %c0_24 = arith.constant 0 : index
    %c0_25 = arith.constant 0 : index
    %50 = vector.load %arg12[%c0_24, %c0_25] : memref<1x32xf32, #tpu.memory_space<vmem>>, vector<1x32xf32>
    %51 = vector.broadcast %50 : vector<1x32xf32> to vector<8x32xf32>
    %52 = arith.addf %49, %51 : vector<8x32xf32>
    %53 = arith.addf %52, %4 : vector<8x32xf32>
    %c0_26 = arith.constant 0 : index
    %c0_27 = arith.constant 0 : index
    %54 = vector.load %arg13[%c0_26, %c0_27] : memref<1x32xf32, #tpu.memory_space<vmem>>, vector<1x32xf32>
    %c0_28 = arith.constant 0 : index
    %c0_29 = arith.constant 0 : index
    %55 = vector.load %arg14[%c0_28, %c0_29] : memref<1x32xf32, #tpu.memory_space<vmem>>, vector<1x32xf32>
    %cst_30 = arith.constant dense<0.000000e+00> : vector<8xf32>
    %56 = vector.multi_reduction <add>, %53, %cst_30 [1] : vector<8x32xf32> to vector<8xf32>
    %57 = vector.shape_cast %56 : vector<8xf32> to vector<8x1xf32>
    %cst_31 = arith.constant 3.200000e+01 : f32
    %58 = vector.broadcast %cst_31 : f32 to vector<8x1xf32>
    %59 = arith.divf %57, %58 : vector<8x1xf32>
    %60 = vector.broadcast %59 : vector<8x1xf32> to vector<8x32xf32>
    %61 = arith.subf %53, %60 : vector<8x32xf32>
    %62 = arith.mulf %61, %61 : vector<8x32xf32>
    %cst_32 = arith.constant dense<0.000000e+00> : vector<8xf32>
    %63 = vector.multi_reduction <add>, %62, %cst_32 [1] : vector<8x32xf32> to vector<8xf32>
    %64 = vector.shape_cast %63 : vector<8xf32> to vector<8x1xf32>
    %cst_33 = arith.constant 3.200000e+01 : f32
    %65 = vector.broadcast %cst_33 : f32 to vector<8x1xf32>
    %66 = arith.divf %64, %65 : vector<8x1xf32>
    %67 = vector.broadcast %59 : vector<8x1xf32> to vector<8x32xf32>
    %68 = arith.subf %53, %67 : vector<8x32xf32>
    %cst_34 = arith.constant 9.99999974E-6 : f32
    %69 = vector.broadcast %cst_34 : f32 to vector<8x1xf32>
    %70 = arith.addf %66, %69 : vector<8x1xf32>
    %71 = math.rsqrt %70 : vector<8x1xf32>
    %72 = vector.broadcast %71 : vector<8x1xf32> to vector<8x32xf32>
    %73 = arith.mulf %68, %72 : vector<8x32xf32>
    %74 = vector.broadcast %54 : vector<1x32xf32> to vector<8x32xf32>
    %75 = arith.mulf %73, %74 : vector<8x32xf32>
    %76 = vector.broadcast %55 : vector<1x32xf32> to vector<8x32xf32>
    %77 = arith.addf %75, %76 : vector<8x32xf32>
    %c0_35 = arith.constant 0 : index
    %c0_36 = arith.constant 0 : index
    %78 = vector.load %arg15[%c0_35, %c0_36] : memref<32x128xf32, #tpu.memory_space<vmem>>, vector<32x128xf32>
    %cst_37 = arith.constant dense<0.000000e+00> : vector<8x128xf32>
    %79 = tpu.matmul %77, %78, %cst_37 {dimension_numbers = #tpu.dot_dimension_numbers<[1], [0], [0], [1], [0, 0, 1, 1], [], []>} : vector<8x32xf32>, vector<32x128xf32>, vector<8x128xf32> -> vector<8x128xf32>
    %c0_38 = arith.constant 0 : index
    %c0_39 = arith.constant 0 : index
    %80 = vector.load %arg16[%c0_38, %c0_39] : memref<1x128xf32, #tpu.memory_space<vmem>>, vector<1x128xf32>
    %81 = vector.broadcast %80 : vector<1x128xf32> to vector<8x128xf32>
    %82 = arith.addf %79, %81 : vector<8x128xf32>
    %cst_40 = arith.constant 0.000000e+00 : f32
    %83 = vector.broadcast %cst_40 : f32 to vector<8x128xf32>
    %84 = arith.cmpf oge, %82, %83 : vector<8x128xf32>
    %cst_41 = arith.constant 0.00999999977 : f32
    %85 = vector.broadcast %cst_41 : f32 to vector<8x128xf32>
    %86 = arith.mulf %85, %82 : vector<8x128xf32>
    %87 = arith.select %84, %82, %86 : vector<8x128xi1>, vector<8x128xf32>
    %c0_42 = arith.constant 0 : index
    %c0_43 = arith.constant 0 : index
    %88 = vector.load %arg17[%c0_42, %c0_43] : memref<128x32xf32, #tpu.memory_space<vmem>>, vector<128x32xf32>
    %cst_44 = arith.constant dense<0.000000e+00> : vector<8x32xf32>
    %89 = tpu.matmul %87, %88, %cst_44 {dimension_numbers = #tpu.dot_dimension_numbers<[1], [0], [0], [1], [0, 0, 1, 1], [], []>} : vector<8x128xf32>, vector<128x32xf32>, vector<8x32xf32> -> vector<8x32xf32>
    %c0_45 = arith.constant 0 : index
    %c0_46 = arith.constant 0 : index
    %90 = vector.load %arg18[%c0_45, %c0_46] : memref<1x32xf32, #tpu.memory_space<vmem>>, vector<1x32xf32>
    %91 = vector.broadcast %90 : vector<1x32xf32> to vector<8x32xf32>
    %92 = arith.addf %89, %91 : vector<8x32xf32>
    %cst_47 = arith.constant 0.000000e+00 : f32
    %93 = vector.broadcast %cst_47 : f32 to vector<8x32xf32>
    %94 = arith.cmpf oge, %92, %93 : vector<8x32xf32>
    %cst_48 = arith.constant 0.00999999977 : f32
    %95 = vector.broadcast %cst_48 : f32 to vector<8x32xf32>
    %96 = arith.mulf %95, %92 : vector<8x32xf32>
    %97 = arith.select %94, %92, %96 : vector<8x32xi1>, vector<8x32xf32>
    %98 = arith.addf %97, %77 : vector<8x32xf32>
    %c0_49 = arith.constant 0 : index
    %c0_50 = arith.constant 0 : index
    %99 = vector.load %arg19[%c0_49, %c0_50] : memref<1x32xf32, #tpu.memory_space<vmem>>, vector<1x32xf32>
    %c0_51 = arith.constant 0 : index
    %c0_52 = arith.constant 0 : index
    %100 = vector.load %arg20[%c0_51, %c0_52] : memref<1x32xf32, #tpu.memory_space<vmem>>, vector<1x32xf32>
    %cst_53 = arith.constant dense<0.000000e+00> : vector<8xf32>
    %101 = vector.multi_reduction <add>, %98, %cst_53 [1] : vector<8x32xf32> to vector<8xf32>
    %102 = vector.shape_cast %101 : vector<8xf32> to vector<8x1xf32>
    %cst_54 = arith.constant 3.200000e+01 : f32
    %103 = vector.broadcast %cst_54 : f32 to vector<8x1xf32>
    %104 = arith.divf %102, %103 : vector<8x1xf32>
    %105 = vector.broadcast %104 : vector<8x1xf32> to vector<8x32xf32>
    %106 = arith.subf %98, %105 : vector<8x32xf32>
    %107 = arith.mulf %106, %106 : vector<8x32xf32>
    %cst_55 = arith.constant dense<0.000000e+00> : vector<8xf32>
    %108 = vector.multi_reduction <add>, %107, %cst_55 [1] : vector<8x32xf32> to vector<8xf32>
    %109 = vector.shape_cast %108 : vector<8xf32> to vector<8x1xf32>
    %cst_56 = arith.constant 3.200000e+01 : f32
    %110 = vector.broadcast %cst_56 : f32 to vector<8x1xf32>
    %111 = arith.divf %109, %110 : vector<8x1xf32>
    %112 = vector.broadcast %104 : vector<8x1xf32> to vector<8x32xf32>
    %113 = arith.subf %98, %112 : vector<8x32xf32>
    %cst_57 = arith.constant 9.99999974E-6 : f32
    %114 = vector.broadcast %cst_57 : f32 to vector<8x1xf32>
    %115 = arith.addf %111, %114 : vector<8x1xf32>
    %116 = math.rsqrt %115 : vector<8x1xf32>
    %117 = vector.broadcast %116 : vector<8x1xf32> to vector<8x32xf32>
    %118 = arith.mulf %113, %117 : vector<8x32xf32>
    %119 = vector.broadcast %99 : vector<1x32xf32> to vector<8x32xf32>
    %120 = arith.mulf %118, %119 : vector<8x32xf32>
    %121 = vector.broadcast %100 : vector<1x32xf32> to vector<8x32xf32>
    %122 = arith.addf %120, %121 : vector<8x32xf32>
    %c0_58 = arith.constant 0 : index
    %c0_59 = arith.constant 0 : index
    %c0_60 = arith.constant 0 : index
    %123 = vector.load %arg21[%c0_58, %c0_59, %c0_60] : memref<1x8x32xf32, #tpu.memory_space<vmem>>, vector<1x8x32xf32>
    %124 = vector.shape_cast %123 : vector<1x8x32xf32> to vector<8x32xf32>
    %125 = vector.shape_cast %122 : vector<8x32xf32> to vector<1x8x32xf32>
    tpu.vector_store %arg21[%c0_58, %c0_59, %c0_60], %125 {strides = array<i32>} : memref<1x8x32xf32, #tpu.memory_space<vmem>>, vector<1x8x32xf32>,
    return
  }
  func.func @transform_0(%arg0: i32, %arg1: i32) -> (i32, i32, i32) {
    %c0_i32 = arith.constant 0 : i32
    %c0_i32_0 = arith.constant 0 : i32
    return %arg0, %arg1, %c0_i32 : i32, i32, i32
  }
  func.func @transform_1(%arg0: i32, %arg1: i32) -> (i32, i32, i32) {
    %c0_i32 = arith.constant 0 : i32
    %c0_i32_0 = arith.constant 0 : i32
    %c0_i32_1 = arith.constant 0 : i32
    return %arg0, %c0_i32, %c0_i32_0 : i32, i32, i32
  }
  func.func @transform_2(%arg0: i32, %arg1: i32) -> (i32, i32, i32) {
    %c0_i32 = arith.constant 0 : i32
    %c0_i32_0 = arith.constant 0 : i32
    %c0_i32_1 = arith.constant 0 : i32
    return %arg0, %c0_i32, %c0_i32_0 : i32, i32, i32
  }
  func.func @transform_3(%arg0: i32, %arg1: i32) -> (i32, i32) {
    %c0_i32 = arith.constant 0 : i32
    %c0_i32_0 = arith.constant 0 : i32
    %c0_i32_1 = arith.constant 0 : i32
    return %c0_i32, %c0_i32_0 : i32, i32
  }
  func.func @transform_4(%arg0: i32, %arg1: i32) -> (i32, i32) {
    %c0_i32 = arith.constant 0 : i32
    %c0_i32_0 = arith.constant 0 : i32
    %c0_i32_1 = arith.constant 0 : i32
    return %c0_i32, %c0_i32_0 : i32, i32
  }
  func.func @transform_5(%arg0: i32, %arg1: i32) -> (i32, i32) {
    %c0_i32 = arith.constant 0 : i32
    %c0_i32_0 = arith.constant 0 : i32
    %c0_i32_1 = arith.constant 0 : i32
    return %c0_i32, %c0_i32_0 : i32, i32
  }
  func.func @transform_6(%arg0: i32, %arg1: i32) -> (i32, i32) {
    %c0_i32 = arith.constant 0 : i32
    %c0_i32_0 = arith.constant 0 : i32
    %c0_i32_1 = arith.constant 0 : i32
    return %c0_i32, %c0_i32_0 : i32, i32
  }
  func.func @transform_7(%arg0: i32, %arg1: i32) -> (i32, i32) {
    %c0_i32 = arith.constant 0 : i32
    %c0_i32_0 = arith.constant 0 : i32
    %c0_i32_1 = arith.constant 0 : i32
    return %c0_i32, %c0_i32_0 : i32, i32
  }
  func.func @transform_8(%arg0: i32, %arg1: i32) -> (i32, i32) {
    %c0_i32 = arith.constant 0 : i32
    %c0_i32_0 = arith.constant 0 : i32
    %c0_i32_1 = arith.constant 0 : i32
    return %c0_i32, %c0_i32_0 : i32, i32
  }
  func.func @transform_9(%arg0: i32, %arg1: i32) -> (i32, i32) {
    %c0_i32 = arith.constant 0 : i32
    %c0_i32_0 = arith.constant 0 : i32
    %c0_i32_1 = arith.constant 0 : i32
    return %c0_i32, %c0_i32_0 : i32, i32
  }
  func.func @transform_10(%arg0: i32, %arg1: i32) -> (i32, i32) {
    %c0_i32 = arith.constant 0 : i32
    %c0_i32_0 = arith.constant 0 : i32
    %c0_i32_1 = arith.constant 0 : i32
    return %c0_i32, %c0_i32_0 : i32, i32
  }
  func.func @transform_11(%arg0: i32, %arg1: i32) -> (i32, i32) {
    %c0_i32 = arith.constant 0 : i32
    %c0_i32_0 = arith.constant 0 : i32
    %c0_i32_1 = arith.constant 0 : i32
    return %c0_i32, %c0_i32_0 : i32, i32
  }
  func.func @transform_12(%arg0: i32, %arg1: i32) -> (i32, i32) {
    %c0_i32 = arith.constant 0 : i32
    %c0_i32_0 = arith.constant 0 : i32
    %c0_i32_1 = arith.constant 0 : i32
    return %c0_i32, %c0_i32_0 : i32, i32
  }
  func.func @transform_13(%arg0: i32, %arg1: i32) -> (i32, i32) {
    %c0_i32 = arith.constant 0 : i32
    %c0_i32_0 = arith.constant 0 : i32
    %c0_i32_1 = arith.constant 0 : i32
    return %c0_i32, %c0_i32_0 : i32, i32
  }
  func.func @transform_14(%arg0: i32, %arg1: i32) -> (i32, i32) {
    %c0_i32 = arith.constant 0 : i32
    %c0_i32_0 = arith.constant 0 : i32
    %c0_i32_1 = arith.constant 0 : i32
    return %c0_i32, %c0_i32_0 : i32, i32
  }
  func.func @transform_15(%arg0: i32, %arg1: i32) -> (i32, i32) {
    %c0_i32 = arith.constant 0 : i32
    %c0_i32_0 = arith.constant 0 : i32
    %c0_i32_1 = arith.constant 0 : i32
    return %c0_i32, %c0_i32_0 : i32, i32
  }
  func.func @transform_16(%arg0: i32, %arg1: i32) -> (i32, i32) {
    %c0_i32 = arith.constant 0 : i32
    %c0_i32_0 = arith.constant 0 : i32
    %c0_i32_1 = arith.constant 0 : i32
    return %c0_i32, %c0_i32_0 : i32, i32
  }
  func.func @transform_17(%arg0: i32, %arg1: i32) -> (i32, i32) {
    %c0_i32 = arith.constant 0 : i32
    %c0_i32_0 = arith.constant 0 : i32
    %c0_i32_1 = arith.constant 0 : i32
    return %c0_i32, %c0_i32_0 : i32, i32
  }
  func.func @transform_18(%arg0: i32, %arg1: i32) -> (i32, i32) {
    %c0_i32 = arith.constant 0 : i32
    %c0_i32_0 = arith.constant 0 : i32
    %c0_i32_1 = arith.constant 0 : i32
    return %c0_i32, %c0_i32_0 : i32, i32
  }
  func.func @transform_19(%arg0: i32, %arg1: i32) -> (i32, i32, i32) {
    %c0_i32 = arith.constant 0 : i32
    %c0_i32_0 = arith.constant 0 : i32
    return %arg0, %arg1, %c0_i32 : i32, i32, i32
  }
}

</mosaic_0001>

<llo_original>
// kernel: tpu_custom_call.1
$region0: #{tpu_custom_call.1}
  #allocation0 [shape = 'u32[]', space=smem, size = 0x4, offset = 0x4, fixed_abs, tag = 'smem constant byte address 0x4 - core index']
  #allocation1 [shape = 'u32[144,128]{1,0:T(1,128)}', space=vmem, size = 0x12000, scoped, tag = 'internal scratch']
  #allocation2 [shape = 'f32[8,32]{1,0:T(8,128)}', space=vmem, size = 0x1000, scoped, tag = 'scratch operand']
  #allocation3 [shape = 'f32[8,32]{1,0:T(8,128)}', space=vmem, size = 0x1000, scoped, tag = 'scratch operand']
  %s0 = inlined_call_operand.hbm [shape: f32[2,8,32], index: 0, kind: input, shape index: {}]
  %s1 = inlined_call_operand.hbm [shape: f32[2,8,32], index: 1, kind: input, shape index: {}]
  %s2 = inlined_call_operand.hbm [shape: f32[2,8,32], index: 2, kind: input, shape index: {}]
  %s3 = inlined_call_operand.vmem [shape: f32[32,32], index: 3, kind: input, shape index: {}]
  %s4 = inlined_call_operand.vmem [shape: f32[1,32], index: 4, kind: input, shape index: {}]
  %s5 = inlined_call_operand.vmem [shape: f32[32,32], index: 5, kind: input, shape index: {}]
  %s6 = inlined_call_operand.vmem [shape: f32[1,32], index: 6, kind: input, shape index: {}]
  %s7 = inlined_call_operand.vmem [shape: f32[32,32], index: 7, kind: input, shape index: {}]
  %s8 = inlined_call_operand.vmem [shape: f32[1,32], index: 8, kind: input, shape index: {}]
  %s9 = inlined_call_operand.vmem [shape: f32[32,32], index: 9, kind: input, shape index: {}]
  %s10 = inlined_call_operand.vmem [shape: f32[1,32], index: 10, kind: input, shape index: {}]
  %s11 = inlined_call_operand.vmem [shape: f32[1,32], index: 11, kind: input, shape index: {}]
  %s12 = inlined_call_operand.vmem [shape: f32[1,32], index: 12, kind: input, shape index: {}]
  %s13 = inlined_call_operand.vmem [shape: f32[32,128], index: 13, kind: input, shape index: {}]
  %s14 = inlined_call_operand.vmem [shape: f32[1,128], index: 14, kind: input, shape index: {}]
  %s15 = inlined_call_operand.vmem [shape: f32[128,32], index: 15, kind: input, shape index: {}]
  %s16 = inlined_call_operand.vmem [shape: f32[1,32], index: 16, kind: input, shape index: {}]
  %s17 = inlined_call_operand.vmem [shape: f32[1,32], index: 17, kind: input, shape index: {}]
  %s18 = inlined_call_operand.vmem [shape: f32[1,32], index: 18, kind: input, shape index: {}]
  %s19 = inlined_call_operand.hbm [shape: f32[2,8,32], index: 19, kind: output, shape index: {}]
  %s20 = sld [smem:[#allocation0]]
  $region125: #{tpu_custom_call.1} parent=0
    _
  %s22 = ssub.s32 1, %s20
  %s23 = scalar_select 0, %s22, %s20
  $region1: #{tpu_custom_call.1} parent=0
    #allocation4 [shape = 'u8[8192]{0}', space=vmem, size = 0x2000, scoped, tag = 'input window, operand 0']
    #allocation5 [shape = 's32[2]{0}', space=sflag, size = 0x8, scoped, tag = 'scoped memory for tpu_custom_call.1']
    #allocation6 [shape = 's32[2]{0}', space=sflag, size = 0x8, scoped, tag = 'scoped memory for tpu_custom_call.1']
    #allocation7 [shape = 'u8[8192]{0}', space=vmem, size = 0x2000, scoped, tag = 'input window, operand 1']
    #allocation8 [shape = 's32[2]{0}', space=sflag, size = 0x8, scoped, tag = 'scoped memory for tpu_custom_call.1']
    #allocation9 [shape = 'u8[8192]{0}', space=vmem, size = 0x2000, scoped, tag = 'input window, operand 2']
    #allocation10 [shape = 'u8[8192]{0}', space=vmem, size = 0x2000, scoped, tag = 'output window, operand 0']
    %24 = vsyncpa [#allocation5], 0
    %s25 = scalar_lea.sflag [#allocation5], 1
    %26 = vsyncpa %s25, 0
    %27 = vsyncpa [#allocation8], 0
    %s28 = scalar_lea.sflag [#allocation8], 1
    %29 = vsyncpa %s28, 0
    %30 = vsyncpa [#allocation6], 0
    %s31 = scalar_lea.sflag [#allocation6], 1
    %32 = vsyncpa %s31, 0
    loop: start=0, step=1, limit=4
    $region2: #{tpu_custom_call.1} parent=1 // loop_pre_header
      _
    $region3: #{tpu_custom_call.1} parent=1 // loop_header
      %s34 = sphi 0, %s38
      %p35 = scmp.ge.s32.totalorder %s34, 4
      %s41 = sphi 0, %s53
      %s42 = sphi 0, %s49
      %s43 = sphi 0, %s41
      %s44 = sphi 0, %s42
      %s45 = sphi 0, %s43
      %s46 = sphi 0, %s44
      %s58 = sphi 0, %s60
      %s61 = sphi 0, %s58
      %s62 = sphi 0, %s61
      %s78 = sphi 0, %s62
      %s84 = sphi 0, %s86
      %s87 = sphi 0, %s84
      %s88 = sphi 0, %s87
      %s104 = sphi 0, %s88
      %s110 = sphi 0, %s112
      %s113 = sphi 0, %s110
      %s114 = sphi 0, %s113
      %s130 = sphi 0, %s114
      %s134 = sphi 0, %s134
      %s136 = sphi 0, %s134
      %s137 = sphi 0, %s136
      %s151 = sphi 0, %s137
      %s155 = sphi 0, %s155
      %s157 = sphi 0, %s155
      %s158 = sphi 0, %s157
      %s172 = sphi 0, %s158
      %s176 = sphi 0, %s176
      %s178 = sphi 0, %s176
      %s179 = sphi 0, %s178
      %s193 = sphi 0, %s179
      %s197 = sphi 0, %s197
      %s199 = sphi 0, %s197
      %s200 = sphi 0, %s199
      %s214 = sphi 0, %s200
      %s218 = sphi 0, %s218
      %s220 = sphi 0, %s218
      %s221 = sphi 0, %s220
      %s235 = sphi 0, %s221
      %s239 = sphi 0, %s239
      %s241 = sphi 0, %s239
      %s242 = sphi 0, %s241
      %s256 = sphi 0, %s242
      %s260 = sphi 0, %s260
      %s262 = sphi 0, %s260
      %s263 = sphi 0, %s262
      %s277 = sphi 0, %s263
      %s281 = sphi 0, %s281
      %s283 = sphi 0, %s281
      %s284 = sphi 0, %s283
      %s298 = sphi 0, %s284
      %s302 = sphi 0, %s302
      %s304 = sphi 0, %s302
      %s305 = sphi 0, %s304
      %s319 = sphi 0, %s305
      %s323 = sphi 0, %s323
      %s325 = sphi 0, %s323
      %s326 = sphi 0, %s325
      %s340 = sphi 0, %s326
      %s344 = sphi 0, %s344
      %s346 = sphi 0, %s344
      %s347 = sphi 0, %s346
      %s361 = sphi 0, %s347
      %s365 = sphi 0, %s365
      %s367 = sphi 0, %s365
      %s368 = sphi 0, %s367
      %s382 = sphi 0, %s368
      %s386 = sphi 0, %s386
      %s388 = sphi 0, %s386
      %s389 = sphi 0, %s388
      %s403 = sphi 0, %s389
      %s407 = sphi 0, %s407
      %s409 = sphi 0, %s407
      %s410 = sphi 0, %s409
      %s424 = sphi 0, %s410
      %s428 = sphi 0, %s428
      %s430 = sphi 0, %s428
      %s431 = sphi 0, %s430
      %s445 = sphi 0, %s431
      %s449 = sphi 0, %s449
      %s451 = sphi 0, %s449
      %s452 = sphi 0, %s451
      %s466 = sphi 0, %s452
      %s474 = sphi 0, %s476
      %s477 = sphi 0, %s474
      %s478 = sphi 0, %s477
      %s494 = sphi 0, %s478
    $region4: #{tpu_custom_call.1} parent=1 // loop_header_branch
      %37 = sbr.rel (%p35) target = $region8
    $region5: #{tpu_custom_call.1} parent=1 // loop_body
      %s39 = ssub.s32 %s34, 1
      %s40 = ssub.s32 %s34, 2
      %s47 = sadd.s32 1, %s42
      %p48 = scmp.ge.s32.totalorder %s47, 1
      %s49 = scalar_select %p48, 0, %s47
      %s50 = sadd.s32 1, %s41
      %s51 = scalar_select %p48, %s50, %s41
      %p52 = scmp.ge.s32.totalorder %s51, 2
      %s53 = scalar_select %p52, 0, %s51
      %s54 = ssub.s32 %s41, %s53
      %s55 = ssub.s32 %s42, %s49
      %s56 = sor.u32 %s54, %s55
      %p57 = scmp.eq.s32.totalorder %s56, 0
      %s59 = sadd.s32 %s58, 1
      %s60 = scalar_select %p57, %s58, %s59
      %p63 = pneg %p57
      %p64 = scmp.eq.s32.totalorder %s34, 1
      %p65 = por %p63, %p64
      %p66 = scmp.ne.s32.totalorder %s58, %s61
      %p67 = scmp.eq.s32.totalorder %s34, 0
      %p68 = por %p66, %p67
      %p69 = scmp.ne.s32.totalorder %s58, %s61
      %p70 = scmp.eq.s32.totalorder %s39, 1
      %p71 = por %p69, %p70
      %p72 = scmp.ne.s32.totalorder %s61, %s62
      %p73 = scmp.eq.s32.totalorder %s39, 0
      %p74 = por %p72, %p73
      %p75 = scmp.ne.s32.totalorder %s61, %s62
      %p76 = scmp.eq.s32.totalorder %s40, 1
      %p77 = por %p75, %p76
      %p79 = scmp.ne.s32.totalorder %s62, %s78
      %p80 = scmp.eq.s32.totalorder %s40, 0
      %p81 = por %p79, %p80
      %s82 = ssub.s32 %s41, %s53
      %p83 = scmp.eq.s32.totalorder %s82, 0
      %s85 = sadd.s32 %s84, 1
      %s86 = scalar_select %p83, %s84, %s85
      %p89 = pneg %p83
      %p90 = scmp.eq.s32.totalorder %s34, 1
      %p91 = por %p89, %p90
      %p92 = scmp.ne.s32.totalorder %s84, %s87
      %p93 = scmp.eq.s32.totalorder %s34, 0
      %p94 = por %p92, %p93
      %p95 = scmp.ne.s32.totalorder %s84, %s87
      %p96 = scmp.eq.s32.totalorder %s39, 1
      %p97 = por %p95, %p96
      %p98 = scmp.ne.s32.totalorder %s87, %s88
      %p99 = scmp.eq.s32.totalorder %s39, 0
      %p100 = por %p98, %p99
      %p101 = scmp.ne.s32.totalorder %s87, %s88
      %p102 = scmp.eq.s32.totalorder %s40, 1
      %p103 = por %p101, %p102
      %p105 = scmp.ne.s32.totalorder %s88, %s104
      %p106 = scmp.eq.s32.totalorder %s40, 0
      %p107 = por %p105, %p106
      %s108 = ssub.s32 %s41, %s53
      %p109 = scmp.eq.s32.totalorder %s108, 0
      %s111 = sadd.s32 %s110, 1
      %s112 = scalar_select %p109, %s110, %s111
      %p115 = pneg %p109
      %p116 = scmp.eq.s32.totalorder %s34, 1
      %p117 = por %p115, %p116
      %p118 = scmp.ne.s32.totalorder %s110, %s113
      %p119 = scmp.eq.s32.totalorder %s34, 0
      %p120 = por %p118, %p119
      %p121 = scmp.ne.s32.totalorder %s110, %s113
      %p122 = scmp.eq.s32.totalorder %s39, 1
      %p123 = por %p121, %p122
      %p124 = scmp.ne.s32.totalorder %s113, %s114
      %p125 = scmp.eq.s32.totalorder %s39, 0
      %p126 = por %p124, %p125
      %p127 = scmp.ne.s32.totalorder %s113, %s114
      %p128 = scmp.eq.s32.totalorder %s40, 1
      %p129 = por %p127, %p128
      %p131 = scmp.ne.s32.totalorder %s114, %s130
      %p132 = scmp.eq.s32.totalorder %s40, 0
      %p133 = por %p131, %p132
      %s135 = sadd.s32 %s134, 1
      %p138 = scmp.eq.s32.totalorder %s34, 1
      %p139 = scmp.ne.s32.totalorder %s134, %s136
      %p140 = scmp.eq.s32.totalorder %s34, 0
      %p141 = por %p139, %p140
      %p142 = scmp.ne.s32.totalorder %s134, %s136
      %p143 = scmp.eq.s32.totalorder %s39, 1
      %p144 = por %p142, %p143
      %p145 = scmp.ne.s32.totalorder %s136, %s137
      %p146 = scmp.eq.s32.totalorder %s39, 0
      %p147 = por %p145, %p146
      %p148 = scmp.ne.s32.totalorder %s136, %s137
      %p149 = scmp.eq.s32.totalorder %s40, 1
      %p150 = por %p148, %p149
      %p152 = scmp.ne.s32.totalorder %s137, %s151
      %p153 = scmp.eq.s32.totalorder %s40, 0
      %p154 = por %p152, %p153
      %s156 = sadd.s32 %s155, 1
      %p159 = scmp.eq.s32.totalorder %s34, 1
      %p160 = scmp.ne.s32.totalorder %s155, %s157
      %p161 = scmp.eq.s32.totalorder %s34, 0
      %p162 = por %p160, %p161
      %p163 = scmp.ne.s32.totalorder %s155, %s157
      %p164 = scmp.eq.s32.totalorder %s39, 1
      %p165 = por %p163, %p164
      %p166 = scmp.ne.s32.totalorder %s157, %s158
      %p167 = scmp.eq.s32.totalorder %s39, 0
      %p168 = por %p166, %p167
      %p169 = scmp.ne.s32.totalorder %s157, %s158
      %p170 = scmp.eq.s32.totalorder %s40, 1
      %p171 = por %p169, %p170
      %p173 = scmp.ne.s32.totalorder %s158, %s172
      %p174 = scmp.eq.s32.totalorder %s40, 0
      %p175 = por %p173, %p174
      %s177 = sadd.s32 %s176, 1
      %p180 = scmp.eq.s32.totalorder %s34, 1
      %p181 = scmp.ne.s32.totalorder %s176, %s178
      %p182 = scmp.eq.s32.totalorder %s34, 0
      %p183 = por %p181, %p182
      %p184 = scmp.ne.s32.totalorder %s176, %s178
      %p185 = scmp.eq.s32.totalorder %s39, 1
      %p186 = por %p184, %p185
      %p187 = scmp.ne.s32.totalorder %s178, %s179
      %p188 = scmp.eq.s32.totalorder %s39, 0
      %p189 = por %p187, %p188
      %p190 = scmp.ne.s32.totalorder %s178, %s179
      %p191 = scmp.eq.s32.totalorder %s40, 1
      %p192 = por %p190, %p191
      %p194 = scmp.ne.s32.totalorder %s179, %s193
      %p195 = scmp.eq.s32.totalorder %s40, 0
      %p196 = por %p194, %p195
      %s198 = sadd.s32 %s197, 1
      %p201 = scmp.eq.s32.totalorder %s34, 1
      %p202 = scmp.ne.s32.totalorder %s197, %s199
      %p203 = scmp.eq.s32.totalorder %s34, 0
      %p204 = por %p202, %p203
      %p205 = scmp.ne.s32.totalorder %s197, %s199
      %p206 = scmp.eq.s32.totalorder %s39, 1
      %p207 = por %p205, %p206
      %p208 = scmp.ne.s32.totalorder %s199, %s200
      %p209 = scmp.eq.s32.totalorder %s39, 0
      %p210 = por %p208, %p209
      %p211 = scmp.ne.s32.totalorder %s199, %s200
      %p212 = scmp.eq.s32.totalorder %s40, 1
      %p213 = por %p211, %p212
      %p215 = scmp.ne.s32.totalorder %s200, %s214
      %p216 = scmp.eq.s32.totalorder %s40, 0
      %p217 = por %p215, %p216
      %s219 = sadd.s32 %s218, 1
      %p222 = scmp.eq.s32.totalorder %s34, 1
      %p223 = scmp.ne.s32.totalorder %s218, %s220
      %p224 = scmp.eq.s32.totalorder %s34, 0
      %p225 = por %p223, %p224
      %p226 = scmp.ne.s32.totalorder %s218, %s220
      %p227 = scmp.eq.s32.totalorder %s39, 1
      %p228 = por %p226, %p227
      %p229 = scmp.ne.s32.totalorder %s220, %s221
      %p230 = scmp.eq.s32.totalorder %s39, 0
      %p231 = por %p229, %p230
      %p232 = scmp.ne.s32.totalorder %s220, %s221
      %p233 = scmp.eq.s32.totalorder %s40, 1
      %p234 = por %p232, %p233
      %p236 = scmp.ne.s32.totalorder %s221, %s235
      %p237 = scmp.eq.s32.totalorder %s40, 0
      %p238 = por %p236, %p237
      %s240 = sadd.s32 %s239, 1
      %p243 = scmp.eq.s32.totalorder %s34, 1
      %p244 = scmp.ne.s32.totalorder %s239, %s241
      %p245 = scmp.eq.s32.totalorder %s34, 0
      %p246 = por %p244, %p245
      %p247 = scmp.ne.s32.totalorder %s239, %s241
      %p248 = scmp.eq.s32.totalorder %s39, 1
      %p249 = por %p247, %p248
      %p250 = scmp.ne.s32.totalorder %s241, %s242
      %p251 = scmp.eq.s32.totalorder %s39, 0
      %p252 = por %p250, %p251
      %p253 = scmp.ne.s32.totalorder %s241, %s242
      %p254 = scmp.eq.s32.totalorder %s40, 1
      %p255 = por %p253, %p254
      %p257 = scmp.ne.s32.totalorder %s242, %s256
      %p258 = scmp.eq.s32.totalorder %s40, 0
      %p259 = por %p257, %p258
      %s261 = sadd.s32 %s260, 1
      %p264 = scmp.eq.s32.totalorder %s34, 1
      %p265 = scmp.ne.s32.totalorder %s260, %s262
      %p266 = scmp.eq.s32.totalorder %s34, 0
      %p267 = por %p265, %p266
      %p268 = scmp.ne.s32.totalorder %s260, %s262
      %p269 = scmp.eq.s32.totalorder %s39, 1
      %p270 = por %p268, %p269
      %p271 = scmp.ne.s32.totalorder %s262, %s263
      %p272 = scmp.eq.s32.totalorder %s39, 0
      %p273 = por %p271, %p272
      %p274 = scmp.ne.s32.totalorder %s262, %s263
      %p275 = scmp.eq.s32.totalorder %s40, 1
      %p276 = por %p274, %p275
      %p278 = scmp.ne.s32.totalorder %s263, %s277
      %p279 = scmp.eq.s32.totalorder %s40, 0
      %p280 = por %p278, %p279
      %s282 = sadd.s32 %s281, 1
      %p285 = scmp.eq.s32.totalorder %s34, 1
      %p286 = scmp.ne.s32.totalorder %s281, %s283
      %p287 = scmp.eq.s32.totalorder %s34, 0
      %p288 = por %p286, %p287
      %p289 = scmp.ne.s32.totalorder %s281, %s283
      %p290 = scmp.eq.s32.totalorder %s39, 1
      %p291 = por %p289, %p290
      %p292 = scmp.ne.s32.totalorder %s283, %s284
      %p293 = scmp.eq.s32.totalorder %s39, 0
      %p294 = por %p292, %p293
      %p295 = scmp.ne.s32.totalorder %s283, %s284
      %p296 = scmp.eq.s32.totalorder %s40, 1
      %p297 = por %p295, %p296
      %p299 = scmp.ne.s32.totalorder %s284, %s298
      %p300 = scmp.eq.s32.totalorder %s40, 0
      %p301 = por %p299, %p300
      %s303 = sadd.s32 %s302, 1
      %p306 = scmp.eq.s32.totalorder %s34, 1
      %p307 = scmp.ne.s32.totalorder %s302, %s304
      %p308 = scmp.eq.s32.totalorder %s34, 0
      %p309 = por %p307, %p308
      %p310 = scmp.ne.s32.totalorder %s302, %s304
      %p311 = scmp.eq.s32.totalorder %s39, 1
      %p312 = por %p310, %p311
      %p313 = scmp.ne.s32.totalorder %s304, %s305
      %p314 = scmp.eq.s32.totalorder %s39, 0
      %p315 = por %p313, %p314
      %p316 = scmp.ne.s32.totalorder %s304, %s305
      %p317 = scmp.eq.s32.totalorder %s40, 1
      %p318 = por %p316, %p317
      %p320 = scmp.ne.s32.totalorder %s305, %s319
      %p321 = scmp.eq.s32.totalorder %s40, 0
      %p322 = por %p320, %p321
      %s324 = sadd.s32 %s323, 1
      %p327 = scmp.eq.s32.totalorder %s34, 1
      %p328 = scmp.ne.s32.totalorder %s323, %s325
      %p329 = scmp.eq.s32.totalorder %s34, 0
      %p330 = por %p328, %p329
      %p331 = scmp.ne.s32.totalorder %s323, %s325
      %p332 = scmp.eq.s32.totalorder %s39, 1
      %p333 = por %p331, %p332
      %p334 = scmp.ne.s32.totalorder %s325, %s326
      %p335 = scmp.eq.s32.totalorder %s39, 0
      %p336 = por %p334, %p335
      %p337 = scmp.ne.s32.totalorder %s325, %s326
      %p338 = scmp.eq.s32.totalorder %s40, 1
      %p339 = por %p337, %p338
      %p341 = scmp.ne.s32.totalorder %s326, %s340
      %p342 = scmp.eq.s32.totalorder %s40, 0
      %p343 = por %p341, %p342
      %s345 = sadd.s32 %s344, 1
      %p348 = scmp.eq.s32.totalorder %s34, 1
      %p349 = scmp.ne.s32.totalorder %s344, %s346
      %p350 = scmp.eq.s32.totalorder %s34, 0
      %p351 = por %p349, %p350
      %p352 = scmp.ne.s32.totalorder %s344, %s346
      %p353 = scmp.eq.s32.totalorder %s39, 1
      %p354 = por %p352, %p353
      %p355 = scmp.ne.s32.totalorder %s346, %s347
      %p356 = scmp.eq.s32.totalorder %s39, 0
      %p357 = por %p355, %p356
      %p358 = scmp.ne.s32.totalorder %s346, %s347
      %p359 = scmp.eq.s32.totalorder %s40, 1
      %p360 = por %p358, %p359
      %p362 = scmp.ne.s32.totalorder %s347, %s361
      %p363 = scmp.eq.s32.totalorder %s40, 0
      %p364 = por %p362, %p363
      %s366 = sadd.s32 %s365, 1
      %p369 = scmp.eq.s32.totalorder %s34, 1
      %p370 = scmp.ne.s32.totalorder %s365, %s367
      %p371 = scmp.eq.s32.totalorder %s34, 0
      %p372 = por %p370, %p371
      %p373 = scmp.ne.s32.totalorder %s365, %s367
      %p374 = scmp.eq.s32.totalorder %s39, 1
      %p375 = por %p373, %p374
      %p376 = scmp.ne.s32.totalorder %s367, %s368
      %p377 = scmp.eq.s32.totalorder %s39, 0
      %p378 = por %p376, %p377
      %p379 = scmp.ne.s32.totalorder %s367, %s368
      %p380 = scmp.eq.s32.totalorder %s40, 1
      %p381 = por %p379, %p380
      %p383 = scmp.ne.s32.totalorder %s368, %s382
      %p384 = scmp.eq.s32.totalorder %s40, 0
      %p385 = por %p383, %p384
      %s387 = sadd.s32 %s386, 1
      %p390 = scmp.eq.s32.totalorder %s34, 1
      %p391 = scmp.ne.s32.totalorder %s386, %s388
      %p392 = scmp.eq.s32.totalorder %s34, 0
      %p393 = por %p391, %p392
      %p394 = scmp.ne.s32.totalorder %s386, %s388
      %p395 = scmp.eq.s32.totalorder %s39, 1
      %p396 = por %p394, %p395
      %p397 = scmp.ne.s32.totalorder %s388, %s389
      %p398 = scmp.eq.s32.totalorder %s39, 0
      %p399 = por %p397, %p398
      %p400 = scmp.ne.s32.totalorder %s388, %s389
      %p401 = scmp.eq.s32.totalorder %s40, 1
      %p402 = por %p400, %p401
      %p404 = scmp.ne.s32.totalorder %s389, %s403
      %p405 = scmp.eq.s32.totalorder %s40, 0
      %p406 = por %p404, %p405
      %s408 = sadd.s32 %s407, 1
      %p411 = scmp.eq.s32.totalorder %s34, 1
      %p412 = scmp.ne.s32.totalorder %s407, %s409
      %p413 = scmp.eq.s32.totalorder %s34, 0
      %p414 = por %p412, %p413
      %p415 = scmp.ne.s32.totalorder %s407, %s409
      %p416 = scmp.eq.s32.totalorder %s39, 1
      %p417 = por %p415, %p416
      %p418 = scmp.ne.s32.totalorder %s409, %s410
      %p419 = scmp.eq.s32.totalorder %s39, 0
      %p420 = por %p418, %p419
      %p421 = scmp.ne.s32.totalorder %s409, %s410
      %p422 = scmp.eq.s32.totalorder %s40, 1
      %p423 = por %p421, %p422
      %p425 = scmp.ne.s32.totalorder %s410, %s424
      %p426 = scmp.eq.s32.totalorder %s40, 0
      %p427 = por %p425, %p426
      %s429 = sadd.s32 %s428, 1
      %p432 = scmp.eq.s32.totalorder %s34, 1
      %p433 = scmp.ne.s32.totalorder %s428, %s430
      %p434 = scmp.eq.s32.totalorder %s34, 0
      %p435 = por %p433, %p434
      %p436 = scmp.ne.s32.totalorder %s428, %s430
      %p437 = scmp.eq.s32.totalorder %s39, 1
      %p438 = por %p436, %p437
      %p439 = scmp.ne.s32.totalorder %s430, %s431
      %p440 = scmp.eq.s32.totalorder %s39, 0
      %p441 = por %p439, %p440
      %p442 = scmp.ne.s32.totalorder %s430, %s431
      %p443 = scmp.eq.s32.totalorder %s40, 1
      %p444 = por %p442, %p443
      %p446 = scmp.ne.s32.totalorder %s431, %s445
      %p447 = scmp.eq.s32.totalorder %s40, 0
      %p448 = por %p446, %p447
      %s450 = sadd.s32 %s449, 1
      %p453 = scmp.eq.s32.totalorder %s34, 1
      %p454 = scmp.ne.s32.totalorder %s449, %s451
      %p455 = scmp.eq.s32.totalorder %s34, 0
      %p456 = por %p454, %p455
      %p457 = scmp.ne.s32.totalorder %s449, %s451
      %p458 = scmp.eq.s32.totalorder %s39, 1
      %p459 = por %p457, %p458
      %p460 = scmp.ne.s32.totalorder %s451, %s452
      %p461 = scmp.eq.s32.totalorder %s39, 0
      %p462 = por %p460, %p461
      %p463 = scmp.ne.s32.totalorder %s451, %s452
      %p464 = scmp.eq.s32.totalorder %s40, 1
      %p465 = por %p463, %p464
      %p467 = scmp.ne.s32.totalorder %s452, %s466
      %p468 = scmp.eq.s32.totalorder %s40, 0
      %p469 = por %p467, %p468
      %s470 = ssub.s32 %s41, %s53
      %s471 = ssub.s32 %s42, %s49
      %s472 = sor.u32 %s470, %s471
      %p473 = scmp.eq.s32.totalorder %s472, 0
      %s475 = sadd.s32 %s474, 1
      %s476 = scalar_select %p473, %s474, %s475
      %p479 = pneg %p473
      %p480 = scmp.eq.s32.totalorder %s34, 1
      %p481 = por %p479, %p480
      %p482 = scmp.ne.s32.totalorder %s474, %s477
      %p483 = scmp.eq.s32.totalorder %s34, 0
      %p484 = por %p482, %p483
      %p485 = scmp.ne.s32.totalorder %s474, %s477
      %p486 = scmp.eq.s32.totalorder %s39, 1
      %p487 = por %p485, %p486
      %p488 = scmp.ne.s32.totalorder %s477, %s478
      %p489 = scmp.eq.s32.totalorder %s39, 0
      %p490 = por %p488, %p489
      %p491 = scmp.ne.s32.totalorder %s477, %s478
      %p492 = scmp.eq.s32.totalorder %s40, 1
      %p493 = por %p491, %p492
      %p495 = scmp.ne.s32.totalorder %s478, %s494
      %p496 = scmp.eq.s32.totalorder %s40, 0
      %p497 = por %p495, %p496
      %p498 = scmp.le.s32.totalorder 1, %s34
      %p499 = scmp.lt.s32.totalorder %s34, 3
      %p500 = pnand %p498, %p499
      %p501 = pneg %p500
      // Predicated region
      $region9: #{tpu_custom_call.1} parent=5 // pred_check
        _
      $region10: #{tpu_custom_call.1} parent=5 // pred_check_branch
        %503 = sbr.rel (%p500) target = $region12
      $region11: #{tpu_custom_call.1} parent=5 // pred_region
        %s504 = ssub.s32 %s34, 1
        // Predicated region
        $region13: #{tpu_custom_call.1} parent=11 // pred_check
          %p505 = pneg %p147
        $region14: #{tpu_custom_call.1} parent=11 // pred_check_branch
          %507 = sbr.rel (%p505) target = $region16
        $region15: #{tpu_custom_call.1} parent=11 // pred_region
          _
        $region16: #{tpu_custom_call.1} parent=11 // pred_fallthru
          _
        // Predicated region
        $region17: #{tpu_custom_call.1} parent=11 // pred_check
          %p508 = pneg %p168
        $region18: #{tpu_custom_call.1} parent=11 // pred_check_branch
          %510 = sbr.rel (%p508) target = $region20
        $region19: #{tpu_custom_call.1} parent=11 // pred_region
          _
        $region20: #{tpu_custom_call.1} parent=11 // pred_fallthru
          _
        // Predicated region
        $region21: #{tpu_custom_call.1} parent=11 // pred_check
          %p511 = pneg %p189
        $region22: #{tpu_custom_call.1} parent=11 // pred_check_branch
          %513 = sbr.rel (%p511) target = $region24
        $region23: #{tpu_custom_call.1} parent=11 // pred_region
          _
        $region24: #{tpu_custom_call.1} parent=11 // pred_fallthru
          _
        // Predicated region
        $region25: #{tpu_custom_call.1} parent=11 // pred_check
          %p514 = pneg %p210
        $region26: #{tpu_custom_call.1} parent=11 // pred_check_branch
          %516 = sbr.rel (%p514) target = $region28
        $region27: #{tpu_custom_call.1} parent=11 // pred_region
          _
        $region28: #{tpu_custom_call.1} parent=11 // pred_fallthru
          _
        // Predicated region
        $region29: #{tpu_custom_call.1} parent=11 // pred_check
          %p517 = pneg %p231
        $region30: #{tpu_custom_call.1} parent=11 // pred_check_branch
          %519 = sbr.rel (%p517) target = $region32
        $region31: #{tpu_custom_call.1} parent=11 // pred_region
          _
        $region32: #{tpu_custom_call.1} parent=11 // pred_fallthru
          _
        // Predicated region
        $region33: #{tpu_custom_call.1} parent=11 // pred_check
          %p520 = pneg %p252
        $region34: #{tpu_custom_call.1} parent=11 // pred_check_branch
          %522 = sbr.rel (%p520) target = $region36
        $region35: #{tpu_custom_call.1} parent=11 // pred_region
          _
        $region36: #{tpu_custom_call.1} parent=11 // pred_fallthru
          _
        // Predicated region
        $region37: #{tpu_custom_call.1} parent=11 // pred_check
          %p523 = pneg %p273
        $region38: #{tpu_custom_call.1} parent=11 // pred_check_branch
          %525 = sbr.rel (%p523) target = $region40
        $region39: #{tpu_custom_call.1} parent=11 // pred_region
          _
        $region40: #{tpu_custom_call.1} parent=11 // pred_fallthru
          _
        // Predicated region
        $region41: #{tpu_custom_call.1} parent=11 // pred_check
          %p526 = pneg %p294
        $region42: #{tpu_custom_call.1} parent=11 // pred_check_branch
          %528 = sbr.rel (%p526) target = $region44
        $region43: #{tpu_custom_call.1} parent=11 // pred_region
          _
        $region44: #{tpu_custom_call.1} parent=11 // pred_fallthru
          _
        // Predicated region
        $region45: #{tpu_custom_call.1} parent=11 // pred_check
          %p529 = pneg %p315
        $region46: #{tpu_custom_call.1} parent=11 // pred_check_branch
          %531 = sbr.rel (%p529) target = $region48
        $region47: #{tpu_custom_call.1} parent=11 // pred_region
          _
        $region48: #{tpu_custom_call.1} parent=11 // pred_fallthru
          _
        // Predicated region
        $region49: #{tpu_custom_call.1} parent=11 // pred_check
          %p532 = pneg %p336
        $region50: #{tpu_custom_call.1} parent=11 // pred_check_branch
          %534 = sbr.rel (%p532) target = $region52
        $region51: #{tpu_custom_call.1} parent=11 // pred_region
          _
        $region52: #{tpu_custom_call.1} parent=11 // pred_fallthru
          _
        // Predicated region
        $region53: #{tpu_custom_call.1} parent=11 // pred_check
          %p535 = pneg %p357
        $region54: #{tpu_custom_call.1} parent=11 // pred_check_branch
          %537 = sbr.rel (%p535) target = $region56
        $region55: #{tpu_custom_call.1} parent=11 // pred_region
          _
        $region56: #{tpu_custom_call.1} parent=11 // pred_fallthru
          _
        // Predicated region
        $region57: #{tpu_custom_call.1} parent=11 // pred_check
          %p538 = pneg %p378
        $region58: #{tpu_custom_call.1} parent=11 // pred_check_branch
          %540 = sbr.rel (%p538) target = $region60
        $region59: #{tpu_custom_call.1} parent=11 // pred_region
          _
        $region60: #{tpu_custom_call.1} parent=11 // pred_fallthru
          _
        // Predicated region
        $region61: #{tpu_custom_call.1} parent=11 // pred_check
          %p541 = pneg %p399
        $region62: #{tpu_custom_call.1} parent=11 // pred_check_branch
          %543 = sbr.rel (%p541) target = $region64
        $region63: #{tpu_custom_call.1} parent=11 // pred_region
          _
        $region64: #{tpu_custom_call.1} parent=11 // pred_fallthru
          _
        // Predicated region
        $region65: #{tpu_custom_call.1} parent=11 // pred_check
          %p544 = pneg %p420
        $region66: #{tpu_custom_call.1} parent=11 // pred_check_branch
          %546 = sbr.rel (%p544) target = $region68
        $region67: #{tpu_custom_call.1} parent=11 // pred_region
          _
        $region68: #{tpu_custom_call.1} parent=11 // pred_fallthru
          _
        // Predicated region
        $region69: #{tpu_custom_call.1} parent=11 // pred_check
          %p547 = pneg %p441
        $region70: #{tpu_custom_call.1} parent=11 // pred_check_branch
          %549 = sbr.rel (%p547) target = $region72
        $region71: #{tpu_custom_call.1} parent=11 // pred_region
          _
        $region72: #{tpu_custom_call.1} parent=11 // pred_fallthru
          _
        // Predicated region
        $region73: #{tpu_custom_call.1} parent=11 // pred_check
          %p550 = pneg %p462
        $region74: #{tpu_custom_call.1} parent=11 // pred_check_branch
          %552 = sbr.rel (%p550) target = $region76
        $region75: #{tpu_custom_call.1} parent=11 // pred_region
          _
        $region76: #{tpu_custom_call.1} parent=11 // pred_fallthru
          _
      $region12: #{tpu_custom_call.1} parent=5 // pred_fallthru
        _
      %p553 = scmp.lt.s32.totalorder %s34, 2
      // Predicated region
      $region77: #{tpu_custom_call.1} parent=5 // pred_check
        %p554 = pneg %p553
      $region78: #{tpu_custom_call.1} parent=5 // pred_check_branch
        %556 = sbr.rel (%p554) target = $region80
      $region79: #{tpu_custom_call.1} parent=5 // pred_region
        // Predicated region
        $region81: #{tpu_custom_call.1} parent=79 // pred_check
          %p557 = pneg %p68
        $region82: #{tpu_custom_call.1} parent=79 // pred_check_branch
          %559 = sbr.rel (%p557) target = $region84
        $region83: #{tpu_custom_call.1} parent=79 // pred_region
          %s560 = sand.u32 %s58, 1
          %s561 = scalar_lea.sflag [#allocation5], %s560
          %s562 = sand.u32 %s58, 1
          %s563 = smul.addr %s562, 8
          %s564 = scalar_lea.vmem [#allocation4], %s563
          %s566 = ssub.s32 128, 128
          %567 = vsyncadd %s561, %s566
          %s568 = sadd.s32 %s42, %s41
          %s569 = smul.addr %s568, 128
          %s570 = scalar_lea.hbm %s0, %s569
          %s572 = sshll.u32 %s564, 4
          %s573 = int_to_ptr.vmem [resolvable:$true] %s572
          %575 = dma.hbm_to_vmem [thread:$0]  %s570, 128, %s573, %s561
        $region84: #{tpu_custom_call.1} parent=79 // pred_fallthru
          _
        // Predicated region
        $region85: #{tpu_custom_call.1} parent=79 // pred_check
          %p576 = pneg %p94
        $region86: #{tpu_custom_call.1} parent=79 // pred_check_branch
          %578 = sbr.rel (%p576) target = $region88
        $region87: #{tpu_custom_call.1} parent=79 // pred_region
          %s579 = sand.u32 %s34, 1
          %s580 = scalar_lea.sflag [#allocation8], %s579
          %s581 = sand.u32 %s84, 1
          %s582 = smul.addr %s581, 8
          %s583 = scalar_lea.vmem [#allocation7], %s582
          %s585 = ssub.s32 128, 128
          %586 = vsyncadd %s580, %s585
          %s587 = smul.addr %s41, 128
          %s588 = scalar_lea.hbm %s1, %s587
          %s590 = sshll.u32 %s583, 4
          %s591 = int_to_ptr.vmem [resolvable:$true] %s590
          %593 = dma.hbm_to_vmem [thread:$0]  %s588, 128, %s591, %s580
        $region88: #{tpu_custom_call.1} parent=79 // pred_fallthru
          _
        // Predicated region
        $region89: #{tpu_custom_call.1} parent=79 // pred_check
          %p594 = pneg %p120
        $region90: #{tpu_custom_call.1} parent=79 // pred_check_branch
          %596 = sbr.rel (%p594) target = $region92
        $region91: #{tpu_custom_call.1} parent=79 // pred_region
          %s597 = sand.u32 %s34, 1
          %s598 = scalar_lea.sflag [#allocation8], %s597
          %s599 = sand.u32 %s110, 1
          %s600 = smul.addr %s599, 8
          %s601 = scalar_lea.vmem [#allocation9], %s600
          %s603 = ssub.s32 128, 128
          %604 = vsyncadd %s598, %s603
          %s605 = smul.addr %s41, 128
          %s606 = scalar_lea.hbm %s2, %s605
          %s608 = sshll.u32 %s601, 4
          %s609 = int_to_ptr.vmem [resolvable:$true] %s608
          %611 = dma.hbm_to_vmem [thread:$0]  %s606, 128, %s609, %s598
        $region92: #{tpu_custom_call.1} parent=79 // pred_fallthru
          _
      $region80: #{tpu_custom_call.1} parent=5 // pred_fallthru
        _
      %p612 = scmp.le.s32.totalorder 1, %s34
      %p613 = scmp.lt.s32.totalorder %s34, 3
      %p614 = pnand %p612, %p613
      %p615 = pneg %p614
      // Predicated region
      $region93: #{tpu_custom_call.1} parent=5 // pred_check
        _
      $region94: #{tpu_custom_call.1} parent=5 // pred_check_branch
        %617 = sbr.rel (%p614) target = $region96
      $region95: #{tpu_custom_call.1} parent=5 // pred_region
        %s618 = ssub.s32 %s34, 1
        %s619 = sand.u32 %s61, 1
        %s620 = scalar_lea.sflag [#allocation5], %s619
        %s621 = sand.u32 %s61, 1
        %s622 = smul.addr %s621, 8
        %s623 = scalar_lea.vmem [#allocation4], %s622
        // Predicated region
        $region97: #{tpu_custom_call.1} parent=95 // pred_check
          %p624 = pneg %p74
        $region98: #{tpu_custom_call.1} parent=95 // pred_check_branch
          %626 = sbr.rel (%p624) target = $region100
        $region99: #{tpu_custom_call.1} parent=95 // pred_region
          %627 = dma.done %s620, 128
        $region100: #{tpu_custom_call.1} parent=95 // pred_fallthru
          _
        %s628 = sand.u32 %s39, 1
        %s629 = scalar_lea.sflag [#allocation8], %s628
        %s630 = sand.u32 %s87, 1
        %s631 = smul.addr %s630, 8
        %s632 = scalar_lea.vmem [#allocation7], %s631
        // Predicated region
        $region101: #{tpu_custom_call.1} parent=95 // pred_check
          %p633 = pneg %p100
        $region102: #{tpu_custom_call.1} parent=95 // pred_check_branch
          %635 = sbr.rel (%p633) target = $region104
        $region103: #{tpu_custom_call.1} parent=95 // pred_region
          %636 = dma.done %s629, 128
        $region104: #{tpu_custom_call.1} parent=95 // pred_fallthru
          _
        %s637 = sand.u32 %s39, 1
        %s638 = scalar_lea.sflag [#allocation8], %s637
        %s639 = sand.u32 %s113, 1
        %s640 = smul.addr %s639, 8
        %s641 = scalar_lea.vmem [#allocation9], %s640
        // Predicated region
        $region105: #{tpu_custom_call.1} parent=95 // pred_check
          %p642 = pneg %p126
        $region106: #{tpu_custom_call.1} parent=95 // pred_check_branch
          %644 = sbr.rel (%p642) target = $region108
        $region107: #{tpu_custom_call.1} parent=95 // pred_region
          %645 = dma.done %s638, 128
        $region108: #{tpu_custom_call.1} parent=95 // pred_fallthru
          _
        %s646 = sand.u32 %s61, 1
        %s647 = scalar_lea.sflag [#allocation5], %s646
        %s648 = sand.u32 %s61, 1
        %s649 = smul.addr %s648, 8
        %s650 = scalar_lea.vmem [#allocation4], %s649
        %p651 = pneg %p74
        %p652 = pneg %p71
        %s653 = sand.u32 %s39, 1
        %s654 = scalar_lea.sflag [#allocation8], %s653
        %s655 = sand.u32 %s87, 1
        %s656 = smul.addr %s655, 8
        %s657 = scalar_lea.vmem [#allocation7], %s656
        %p658 = pneg %p100
        %p659 = pneg %p97
        %s660 = sand.u32 %s39, 1
        %s661 = scalar_lea.sflag [#allocation8], %s660
        %s662 = sand.u32 %s113, 1
        %s663 = smul.addr %s662, 8
        %s664 = scalar_lea.vmem [#allocation9], %s663
        %p665 = pneg %p126
        %p666 = pneg %p123
        %p667 = pneg %p147
        %p668 = pneg %p144
        %p669 = pneg %p168
        %p670 = pneg %p165
        %p671 = pneg %p189
        %p672 = pneg %p186
        %p673 = pneg %p210
        %p674 = pneg %p207
        %p675 = pneg %p231
        %p676 = pneg %p228
        %p677 = pneg %p252
        %p678 = pneg %p249
        %p679 = pneg %p273
        %p680 = pneg %p270
        %p681 = pneg %p294
        %p682 = pneg %p291
        %p683 = pneg %p315
        %p684 = pneg %p312
        %p685 = pneg %p336
        %p686 = pneg %p333
        %p687 = pneg %p357
        %p688 = pneg %p354
        %p689 = pneg %p378
        %p690 = pneg %p375
        %p691 = pneg %p399
        %p692 = pneg %p396
        %p693 = pneg %p420
        %p694 = pneg %p417
        %p695 = pneg %p441
        %p696 = pneg %p438
        %p697 = pneg %p462
        %p698 = pneg %p459
        %p699 = pneg %p490
        %p700 = pneg %p487
        %s701 = sand.u32 %s477, 1
        %s702 = scalar_lea.sflag [#allocation6], %s701
        %s703 = sand.u32 %s477, 1
        %s704 = smul.addr %s703, 8
        %s705 = scalar_lea.vmem [#allocation10], %s704
        %p706 = scmp.eq.s32.totalorder %s44, 0
        // Predicated region
        $region109: #{tpu_custom_call.1} parent=95 // pred_check
          %p707 = pneg %p706
        $region110: #{tpu_custom_call.1} parent=95 // pred_check_branch
          %709 = sbr.rel (%p707) target = $region112
        $region111: #{tpu_custom_call.1} parent=95 // pred_region
          %v710 = vld [vmem:[%s632] sm:$0xff]
          %v711 = vld [vmem:[%s641] sm:$0xff]
          %v712 = vld [vmem:[%s5] sm:$0xff]
          %v713 = vld [vmem:[%s5 + $0x8] sm:$0xff]
          %v714 = vld [vmem:[%s5 + $0x10] sm:$0xff]
          %v715 = vld [vmem:[%s5 + $0x18] sm:$0xff]
          %v716 = vld [vmem:[%s6] sm:$0x1]
          %v718 = vlaneseq
          %v719 = vshrl.u32 %v718, 7
          %v720 = vsub.s32 0, %v719
          %v721 = vrot.slane %v716, %v720
          %vm723 = vcmask 261120
          %v725 = vsel %vm723, %v710, 0
          %727 = vmatprep.subr.mxu0 0.0
          %728 = vmatpush1.msra.mxu0 0.0
          %729 = vmatprep.subr.mxu0 0.0
          %730 = vmatpush1.msra.mxu0 0.0
          %731 = vmatprep.subr.mxu0 0.0
          %732 = vmatpush1.msra.mxu0 0.0
          %733 = vmatprep.subr.mxu0 0.0
          %734 = vmatpush1.msra.mxu0 0.0
          %735 = vmatprep.subr.mxu0 0.0
          %736 = vmatpush1.msra.mxu0 0.0
          %737 = vmatprep.subr.mxu0 0.0
          %738 = vmatpush1.msra.mxu0 0.0
          %739 = vmatprep.subr.mxu0 0.0
          %740 = vmatpush1.msra.mxu0 0.0
          %741 = vmatprep.subr.mxu0 0.0
          %742 = vmatpush1.msra.mxu0 0.0
          %743 = vmatprep.subr.mxu0 0.0
          %744 = vmatpush1.msra.mxu0 0.0
          %745 = vmatprep.subr.mxu0 0.0
          %746 = vmatpush1.msra.mxu0 0.0
          %747 = vmatprep.subr.mxu0 0.0
          %748 = vmatpush1.msra.mxu0 0.0
          %749 = vmatprep.subr.mxu0 0.0
          %750 = vmatpush1.msra.mxu0 0.0
          %751 = vmatprep.subr.mxu0 0.0
          %752 = vmatpush1.msra.mxu0 %v715
          %753 = vmatprep.subr.mxu0 0.0
          %754 = vmatpush1.msra.mxu0 %v714
          %755 = vmatprep.subr.mxu0 0.0
          %756 = vmatpush1.msra.mxu0 %v713
          %757 = vmatprep.subr.mxu0 0.0
          %758 = vmatpush1.msra.mxu0 %v712
          %759 = vmatprep.subr.mxu0 0.0
          %760 = vmatpush2.msra.mxu0 0.0
          %761 = vmatprep.subr.mxu0 0.0
          %762 = vmatpush2.msra.mxu0 0.0
          %763 = vmatprep.subr.mxu0 0.0
          %764 = vmatpush2.msra.mxu0 0.0
          %765 = vmatprep.subr.mxu0 0.0
          %766 = vmatpush2.msra.mxu0 0.0
          %767 = vmatprep.subr.mxu0 0.0
          %768 = vmatpush2.msra.mxu0 0.0
          %769 = vmatprep.subr.mxu0 0.0
          %770 = vmatpush2.msra.mxu0 0.0
          %771 = vmatprep.subr.mxu0 0.0
          %772 = vmatpush2.msra.mxu0 0.0
          %773 = vmatprep.subr.mxu0 0.0
          %774 = vmatpush2.msra.mxu0 0.0
          %775 = vmatprep.subr.mxu0 0.0
          %776 = vmatpush2.msra.mxu0 0.0
          %777 = vmatprep.subr.mxu0 0.0
          %778 = vmatpush2.msra.mxu0 0.0
          %779 = vmatprep.subr.mxu0 0.0
          %780 = vmatpush2.msra.mxu0 0.0
          %781 = vmatprep.subr.mxu0 0.0
          %782 = vmatpush2.msra.mxu0 0.0
          %783 = vmatprep.subr.mxu0 0.0
          %784 = vmatpush2.msra.mxu0 0.0
          %785 = vmatprep.subr.mxu0 0.0
          %786 = vmatpush2.msra.mxu0 0.0
          %787 = vmatprep.subr.mxu0 0.0
          %788 = vmatpush2.msra.mxu0 0.0
          %789 = vmatprep.subr.mxu0 0.0
          %790 = vmatpush2.msra.mxu0 0.0
          %791 = vmatprep.mubr.f32.mxu0 0.0
          %792 = vmatmul.mubr.f32.gmra.mxu0 %v725
          %v793 = vpop.f32.mrf.mxu0
          %v794 = vadd.f32 %v721, %v793
          %v795 = vpop.f32.mrf.mxu0
          %796 = vdwg.mxu0
          %797 = vst.msk [vmem:[#allocation2] sm:$0xff] %vm723, %v794
          %v798 = vld [vmem:[%s7] sm:$0xff]
          %v799 = vld [vmem:[%s7 + $0x8] sm:$0xff]
          %v800 = vld [vmem:[%s7 + $0x10] sm:$0xff]
          %v801 = vld [vmem:[%s7 + $0x18] sm:$0xff]
          %v802 = vld [vmem:[%s8] sm:$0x1]
          %v804 = vlaneseq
          %v805 = vshrl.u32 %v804, 7
          %v806 = vsub.s32 0, %v805
          %v807 = vrot.slane %v802, %v806
          %v810 = vsel %vm723, %v711, 0
          %812 = vmatprep.subr.mxu0 0.0
          %813 = vmatpush1.msra.mxu0 0.0
          %814 = vmatprep.subr.mxu0 0.0
          %815 = vmatpush1.msra.mxu0 0.0
          %816 = vmatprep.subr.mxu0 0.0
          %817 = vmatpush1.msra.mxu0 0.0
          %818 = vmatprep.subr.mxu0 0.0
          %819 = vmatpush1.msra.mxu0 0.0
          %820 = vmatprep.subr.mxu0 0.0
          %821 = vmatpush1.msra.mxu0 0.0
          %822 = vmatprep.subr.mxu0 0.0
          %823 = vmatpush1.msra.mxu0 0.0
          %824 = vmatprep.subr.mxu0 0.0
          %825 = vmatpush1.msra.mxu0 0.0
          %826 = vmatprep.subr.mxu0 0.0
          %827 = vmatpush1.msra.mxu0 0.0
          %828 = vmatprep.subr.mxu0 0.0
          %829 = vmatpush1.msra.mxu0 0.0
          %830 = vmatprep.subr.mxu0 0.0
          %831 = vmatpush1.msra.mxu0 0.0
          %832 = vmatprep.subr.mxu0 0.0
          %833 = vmatpush1.msra.mxu0 0.0
          %834 = vmatprep.subr.mxu0 0.0
          %835 = vmatpush1.msra.mxu0 0.0
          %836 = vmatprep.subr.mxu0 0.0
          %837 = vmatpush1.msra.mxu0 %v801
          %838 = vmatprep.subr.mxu0 0.0
          %839 = vmatpush1.msra.mxu0 %v800
          %840 = vmatprep.subr.mxu0 0.0
          %841 = vmatpush1.msra.mxu0 %v799
          %842 = vmatprep.subr.mxu0 0.0
          %843 = vmatpush1.msra.mxu0 %v798
          %844 = vmatprep.subr.mxu0 0.0
          %845 = vmatpush2.msra.mxu0 0.0
          %846 = vmatprep.subr.mxu0 0.0
          %847 = vmatpush2.msra.mxu0 0.0
          %848 = vmatprep.subr.mxu0 0.0
          %849 = vmatpush2.msra.mxu0 0.0
          %850 = vmatprep.subr.mxu0 0.0
          %851 = vmatpush2.msra.mxu0 0.0
          %852 = vmatprep.subr.mxu0 0.0
          %853 = vmatpush2.msra.mxu0 0.0
          %854 = vmatprep.subr.mxu0 0.0
          %855 = vmatpush2.msra.mxu0 0.0
          %856 = vmatprep.subr.mxu0 0.0
          %857 = vmatpush2.msra.mxu0 0.0
          %858 = vmatprep.subr.mxu0 0.0
          %859 = vmatpush2.msra.mxu0 0.0
          %860 = vmatprep.subr.mxu0 0.0
          %861 = vmatpush2.msra.mxu0 0.0
          %862 = vmatprep.subr.mxu0 0.0
          %863 = vmatpush2.msra.mxu0 0.0
          %864 = vmatprep.subr.mxu0 0.0
          %865 = vmatpush2.msra.mxu0 0.0
          %866 = vmatprep.subr.mxu0 0.0
          %867 = vmatpush2.msra.mxu0 0.0
          %868 = vmatprep.subr.mxu0 0.0
          %869 = vmatpush2.msra.mxu0 0.0
          %870 = vmatprep.subr.mxu0 0.0
          %871 = vmatpush2.msra.mxu0 0.0
          %872 = vmatprep.subr.mxu0 0.0
          %873 = vmatpush2.msra.mxu0 0.0
          %874 = vmatprep.subr.mxu0 0.0
          %875 = vmatpush2.msra.mxu0 0.0
          %876 = vmatprep.mubr.f32.mxu0 0.0
          %877 = vmatmul.mubr.f32.gmra.mxu0 %v810
          %v878 = vpop.f32.mrf.mxu0
          %v879 = vadd.f32 %v807, %v878
          %v880 = vpop.f32.mrf.mxu0
          %881 = vdwg.mxu0
          %882 = vst.msk [vmem:[#allocation3] sm:$0xff] %vm723, %v879
        $region112: #{tpu_custom_call.1} parent=95 // pred_fallthru
          _
        %v883 = vld [vmem:[%s623] sm:$0xff]
        %v884 = vld [vmem:[%s3] sm:$0xff]
        %v885 = vld [vmem:[%s3 + $0x8] sm:$0xff]
        %v886 = vld [vmem:[%s3 + $0x10] sm:$0xff]
        %v887 = vld [vmem:[%s3 + $0x18] sm:$0xff]
        %v888 = vld [vmem:[%s4] sm:$0x1]
        %v890 = vlaneseq
        %v891 = vshrl.u32 %v890, 7
        %v892 = vsub.s32 0, %v891
        %v893 = vrot.slane %v888, %v892
        %vm895 = vcmask 261120
        %v897 = vsel %vm895, %v883, 0
        %899 = vmatprep.subr.mxu0 0.0
        %900 = vmatpush1.msra.mxu0 0.0
        %901 = vmatprep.subr.mxu0 0.0
        %902 = vmatpush1.msra.mxu0 0.0
        %903 = vmatprep.subr.mxu0 0.0
        %904 = vmatpush1.msra.mxu0 0.0
        %905 = vmatprep.subr.mxu0 0.0
        %906 = vmatpush1.msra.mxu0 0.0
        %907 = vmatprep.subr.mxu0 0.0
        %908 = vmatpush1.msra.mxu0 0.0
        %909 = vmatprep.subr.mxu0 0.0
        %910 = vmatpush1.msra.mxu0 0.0
        %911 = vmatprep.subr.mxu0 0.0
        %912 = vmatpush1.msra.mxu0 0.0
        %913 = vmatprep.subr.mxu0 0.0
        %914 = vmatpush1.msra.mxu0 0.0
        %915 = vmatprep.subr.mxu0 0.0
        %916 = vmatpush1.msra.mxu0 0.0
        %917 = vmatprep.subr.mxu0 0.0
        %918 = vmatpush1.msra.mxu0 0.0
        %919 = vmatprep.subr.mxu0 0.0
        %920 = vmatpush1.msra.mxu0 0.0
        %921 = vmatprep.subr.mxu0 0.0
        %922 = vmatpush1.msra.mxu0 0.0
        %923 = vmatprep.subr.mxu0 0.0
        %924 = vmatpush1.msra.mxu0 %v887
        %925 = vmatprep.subr.mxu0 0.0
        %926 = vmatpush1.msra.mxu0 %v886
        %927 = vmatprep.subr.mxu0 0.0
        %928 = vmatpush1.msra.mxu0 %v885
        %929 = vmatprep.subr.mxu0 0.0
        %930 = vmatpush1.msra.mxu0 %v884
        %931 = vmatprep.subr.mxu0 0.0
        %932 = vmatpush2.msra.mxu0 0.0
        %933 = vmatprep.subr.mxu0 0.0
        %934 = vmatpush2.msra.mxu0 0.0
        %935 = vmatprep.subr.mxu0 0.0
        %936 = vmatpush2.msra.mxu0 0.0
        %937 = vmatprep.subr.mxu0 0.0
        %938 = vmatpush2.msra.mxu0 0.0
        %939 = vmatprep.subr.mxu0 0.0
        %940 = vmatpush2.msra.mxu0 0.0
        %941 = vmatprep.subr.mxu0 0.0
        %942 = vmatpush2.msra.mxu0 0.0
        %943 = vmatprep.subr.mxu0 0.0
        %944 = vmatpush2.msra.mxu0 0.0
        %945 = vmatprep.subr.mxu0 0.0
        %946 = vmatpush2.msra.mxu0 0.0
        %947 = vmatprep.subr.mxu0 0.0
        %948 = vmatpush2.msra.mxu0 0.0
        %949 = vmatprep.subr.mxu0 0.0
        %950 = vmatpush2.msra.mxu0 0.0
        %951 = vmatprep.subr.mxu0 0.0
        %952 = vmatpush2.msra.mxu0 0.0
        %953 = vmatprep.subr.mxu0 0.0
        %954 = vmatpush2.msra.mxu0 0.0
        %955 = vmatprep.subr.mxu0 0.0
        %956 = vmatpush2.msra.mxu0 0.0
        %957 = vmatprep.subr.mxu0 0.0
        %958 = vmatpush2.msra.mxu0 0.0
        %959 = vmatprep.subr.mxu0 0.0
        %960 = vmatpush2.msra.mxu0 0.0
        %961 = vmatprep.subr.mxu0 0.0
        %962 = vmatpush2.msra.mxu0 0.0
        %963 = vmatprep.mubr.f32.mxu0 0.0
        %964 = vmatmul.mubr.f32.gmra.mxu0 %v897
        %v965 = vpop.f32.mrf.mxu0
        %v966 = vadd.f32 %v893, %v965
        %v967 = vpop.f32.mrf.mxu0
        %968 = vdwg.mxu0
        %v969 = vld [vmem:[#allocation2] sm:$0xff]
        %v970 = vld [vmem:[#allocation3] sm:$0xff]
        %v971 = vld [vmem:[%s9] sm:$0xff]
        %v972 = vld [vmem:[%s9 + $0x8] sm:$0xff]
        %v973 = vld [vmem:[%s9 + $0x10] sm:$0xff]
        %v974 = vld [vmem:[%s9 + $0x18] sm:$0xff]
        %vm975 = vcmask 130048
        %v977 = vsel %vm975, %v966, 0
        %v980 = vsel %vm975, %v969, 0
        %982 = vmatprep.subr.mxu0 0.0
        %983 = vmatpush1.xpose.msra.mxu0 0.0
        %984 = vmatprep.subr.mxu0 0.0
        %985 = vmatpush1.xpose.msra.mxu0 0.0
        %986 = vmatprep.subr.mxu0 0.0
        %987 = vmatpush1.xpose.msra.mxu0 0.0
        %988 = vmatprep.subr.mxu0 0.0
        %989 = vmatpush1.xpose.msra.mxu0 0.0
        %990 = vmatprep.subr.mxu0 0.0
        %991 = vmatpush1.xpose.msra.mxu0 0.0
        %992 = vmatprep.subr.mxu0 0.0
        %993 = vmatpush1.xpose.msra.mxu0 0.0
        %994 = vmatprep.subr.mxu0 0.0
        %995 = vmatpush1.xpose.msra.mxu0 0.0
        %996 = vmatprep.subr.mxu0 0.0
        %997 = vmatpush1.xpose.msra.mxu0 0.0
        %998 = vmatprep.subr.mxu0 0.0
        %999 = vmatpush1.xpose.msra.mxu0 0.0
        %1000 = vmatprep.subr.mxu0 0.0
        %1001 = vmatpush1.xpose.msra.mxu0 0.0
        %1002 = vmatprep.subr.mxu0 0.0
        %1003 = vmatpush1.xpose.msra.mxu0 0.0
        %1004 = vmatprep.subr.mxu0 0.0
        %1005 = vmatpush1.xpose.msra.mxu0 0.0
        %1006 = vmatprep.subr.mxu0 0.0
        %1007 = vmatpush1.xpose.msra.mxu0 0.0
        %1008 = vmatprep.subr.mxu0 0.0
        %1009 = vmatpush1.xpose.msra.mxu0 0.0
        %1010 = vmatprep.subr.mxu0 0.0
        %1011 = vmatpush1.xpose.msra.mxu0 0.0
        %1012 = vmatprep.subr.mxu0 0.0
        %1013 = vmatpush1.xpose.msra.mxu0 %v980
        %1014 = vmatprep.subr.mxu0 0.0
        %1015 = vmatpush2.xpose.msra.mxu0 0.0
        %1016 = vmatprep.subr.mxu0 0.0
        %1017 = vmatpush2.xpose.msra.mxu0 0.0
        %1018 = vmatprep.subr.mxu0 0.0
        %1019 = vmatpush2.xpose.msra.mxu0 0.0
        %1020 = vmatprep.subr.mxu0 0.0
        %1021 = vmatpush2.xpose.msra.mxu0 0.0
        %1022 = vmatprep.subr.mxu0 0.0
        %1023 = vmatpush2.xpose.msra.mxu0 0.0
        %1024 = vmatprep.subr.mxu0 0.0
        %1025 = vmatpush2.xpose.msra.mxu0 0.0
        %1026 = vmatprep.subr.mxu0 0.0
        %1027 = vmatpush2.xpose.msra.mxu0 0.0
        %1028 = vmatprep.subr.mxu0 0.0
        %1029 = vmatpush2.xpose.msra.mxu0 0.0
        %1030 = vmatprep.subr.mxu0 0.0
        %1031 = vmatpush2.xpose.msra.mxu0 0.0
        %1032 = vmatprep.subr.mxu0 0.0
        %1033 = vmatpush2.xpose.msra.mxu0 0.0
        %1034 = vmatprep.subr.mxu0 0.0
        %1035 = vmatpush2.xpose.msra.mxu0 0.0
        %1036 = vmatprep.subr.mxu0 0.0
        %1037 = vmatpush2.xpose.msra.mxu0 0.0
        %1038 = vmatprep.subr.mxu0 0.0
        %1039 = vmatpush2.xpose.msra.mxu0 0.0
        %1040 = vmatprep.subr.mxu0 0.0
        %1041 = vmatpush2.xpose.msra.mxu0 0.0
        %1042 = vmatprep.subr.mxu0 0.0
        %1043 = vmatpush2.xpose.msra.mxu0 0.0
        %1044 = vmatprep.subr.mxu0 0.0
        %1045 = vmatpush2.xpose.msra.mxu0 0.0
        %1046 = vmatprep.mubr.f32.mxu0 0.0
        %1047 = vmatmul.mubr.f32.gmra.mxu0 %v977
        %v1048 = vpop.f32.mrf.mxu0
        %v1049 = vadd.f32 0.0, %v1048
        %v1050 = vpop.f32.mrf.mxu0
        %1051 = vdwg.mxu0
        %vm1052 = vcmask 64512
        %v1053 = vsel %vm1052, %v1049, -inf
        %1054 = vmax.xlane.f32.xlu0 %v1053
        %v1055 = vpop.xlane.xlu0 %1054
        %v1056 = vsub.f32 %v1049, %v1055
        %v1057 = vmul.f32 %v1056, 1.442695
        %v1058 = vpow.pop %v1057
        %v1059 = vsel %vm1052, %v1058, 0.0
        %1060 = vadd.xlane.f32.xlu0 %v1059
        %v1061 = vpop.xlane.xlu0 %1060
        %v1063 = vsel %vm1052, %v1058, 0
        %1065 = vmatprep.subr.mxu0 0.0
        %1066 = vmatpush1.msra.mxu0 0.0
        %1067 = vmatprep.subr.mxu0 0.0
        %1068 = vmatpush1.msra.mxu0 0.0
        %1069 = vmatprep.subr.mxu0 0.0
        %1070 = vmatpush1.msra.mxu0 0.0
        %1071 = vmatprep.subr.mxu0 0.0
        %1072 = vmatpush1.msra.mxu0 0.0
        %1073 = vmatprep.subr.mxu0 0.0
        %1074 = vmatpush1.msra.mxu0 0.0
        %1075 = vmatprep.subr.mxu0 0.0
        %1076 = vmatpush1.msra.mxu0 0.0
        %1077 = vmatprep.subr.mxu0 0.0
        %1078 = vmatpush1.msra.mxu0 0.0
        %1079 = vmatprep.subr.mxu0 0.0
        %1080 = vmatpush1.msra.mxu0 0.0
        %1081 = vmatprep.subr.mxu0 0.0
        %1082 = vmatpush1.msra.mxu0 0.0
        %1083 = vmatprep.subr.mxu0 0.0
        %1084 = vmatpush1.msra.mxu0 0.0
        %1085 = vmatprep.subr.mxu0 0.0
        %1086 = vmatpush1.msra.mxu0 0.0
        %1087 = vmatprep.subr.mxu0 0.0
        %1088 = vmatpush1.msra.mxu0 0.0
        %1089 = vmatprep.subr.mxu0 0.0
        %1090 = vmatpush1.msra.mxu0 0.0
        %1091 = vmatprep.subr.mxu0 0.0
        %1092 = vmatpush1.msra.mxu0 0.0
        %1093 = vmatprep.subr.mxu0 0.0
        %1094 = vmatpush1.msra.mxu0 0.0
        %1095 = vmatprep.subr.mxu0 0.0
        %1096 = vmatpush1.msra.mxu0 %v970
        %1097 = vmatprep.subr.mxu0 0.0
        %1098 = vmatpush2.msra.mxu0 0.0
        %1099 = vmatprep.subr.mxu0 0.0
        %1100 = vmatpush2.msra.mxu0 0.0
        %1101 = vmatprep.subr.mxu0 0.0
        %1102 = vmatpush2.msra.mxu0 0.0
        %1103 = vmatprep.subr.mxu0 0.0
        %1104 = vmatpush2.msra.mxu0 0.0
        %1105 = vmatprep.subr.mxu0 0.0
        %1106 = vmatpush2.msra.mxu0 0.0
        %1107 = vmatprep.subr.mxu0 0.0
        %1108 = vmatpush2.msra.mxu0 0.0
        %1109 = vmatprep.subr.mxu0 0.0
        %1110 = vmatpush2.msra.mxu0 0.0
        %1111 = vmatprep.subr.mxu0 0.0
        %1112 = vmatpush2.msra.mxu0 0.0
        %1113 = vmatprep.subr.mxu0 0.0
        %1114 = vmatpush2.msra.mxu0 0.0
        %1115 = vmatprep.subr.mxu0 0.0
        %1116 = vmatpush2.msra.mxu0 0.0
        %1117 = vmatprep.subr.mxu0 0.0
        %1118 = vmatpush2.msra.mxu0 0.0
        %1119 = vmatprep.subr.mxu0 0.0
        %1120 = vmatpush2.msra.mxu0 0.0
        %1121 = vmatprep.subr.mxu0 0.0
        %1122 = vmatpush2.msra.mxu0 0.0
        %1123 = vmatprep.subr.mxu0 0.0
        %1124 = vmatpush2.msra.mxu0 0.0
        %1125 = vmatprep.subr.mxu0 0.0
        %1126 = vmatpush2.msra.mxu0 0.0
        %1127 = vmatprep.subr.mxu0 0.0
        %1128 = vmatpush2.msra.mxu0 0.0
        %1129 = vmatprep.mubr.f32.mxu0 0.0
        %1130 = vmatmul.mubr.f32.gmra.mxu0 %v1063
        %v1131 = vpop.f32.mrf.mxu0
        %v1132 = vadd.f32 0.0, %v1131
        %v1133 = vpop.f32.mrf.mxu0
        %1134 = vdwg.mxu0
        %v1135 = vrcp.pop %v1061
        %v1136 = vmul.f32 %v1132, %v1135
        %1137 = vrot.lane.b32.xlu0 %v966, 112
        %v1138 = vpop.permute.xlu0 %1137
        %1139 = vrot.lane.b32.xlu0 %v969, 112
        %v1140 = vpop.permute.xlu0 %1139
        %v1141 = vsel %vm975, %v1138, 0
        %v1143 = vsel %vm975, %v1140, 0
        %1145 = vmatprep.subr.mxu0 0.0
        %1146 = vmatpush1.xpose.msra.mxu0 0.0
        %1147 = vmatprep.subr.mxu0 0.0
        %1148 = vmatpush1.xpose.msra.mxu0 0.0
        %1149 = vmatprep.subr.mxu0 0.0
        %1150 = vmatpush1.xpose.msra.mxu0 0.0
        %1151 = vmatprep.subr.mxu0 0.0
        %1152 = vmatpush1.xpose.msra.mxu0 0.0
        %1153 = vmatprep.subr.mxu0 0.0
        %1154 = vmatpush1.xpose.msra.mxu0 0.0
        %1155 = vmatprep.subr.mxu0 0.0
        %1156 = vmatpush1.xpose.msra.mxu0 0.0
        %1157 = vmatprep.subr.mxu0 0.0
        %1158 = vmatpush1.xpose.msra.mxu0 0.0
        %1159 = vmatprep.subr.mxu0 0.0
        %1160 = vmatpush1.xpose.msra.mxu0 0.0
        %1161 = vmatprep.subr.mxu0 0.0
        %1162 = vmatpush1.xpose.msra.mxu0 0.0
        %1163 = vmatprep.subr.mxu0 0.0
        %1164 = vmatpush1.xpose.msra.mxu0 0.0
        %1165 = vmatprep.subr.mxu0 0.0
        %1166 = vmatpush1.xpose.msra.mxu0 0.0
        %1167 = vmatprep.subr.mxu0 0.0
        %1168 = vmatpush1.xpose.msra.mxu0 0.0
        %1169 = vmatprep.subr.mxu0 0.0
        %1170 = vmatpush1.xpose.msra.mxu0 0.0
        %1171 = vmatprep.subr.mxu0 0.0
        %1172 = vmatpush1.xpose.msra.mxu0 0.0
        %1173 = vmatprep.subr.mxu0 0.0
        %1174 = vmatpush1.xpose.msra.mxu0 0.0
        %1175 = vmatprep.subr.mxu0 0.0
        %1176 = vmatpush1.xpose.msra.mxu0 %v1143
        %1177 = vmatprep.subr.mxu0 0.0
        %1178 = vmatpush2.xpose.msra.mxu0 0.0
        %1179 = vmatprep.subr.mxu0 0.0
        %1180 = vmatpush2.xpose.msra.mxu0 0.0
        %1181 = vmatprep.subr.mxu0 0.0
        %1182 = vmatpush2.xpose.msra.mxu0 0.0
        %1183 = vmatprep.subr.mxu0 0.0
        %1184 = vmatpush2.xpose.msra.mxu0 0.0
        %1185 = vmatprep.subr.mxu0 0.0
        %1186 = vmatpush2.xpose.msra.mxu0 0.0
        %1187 = vmatprep.subr.mxu0 0.0
        %1188 = vmatpush2.xpose.msra.mxu0 0.0
        %1189 = vmatprep.subr.mxu0 0.0
        %1190 = vmatpush2.xpose.msra.mxu0 0.0
        %1191 = vmatprep.subr.mxu0 0.0
        %1192 = vmatpush2.xpose.msra.mxu0 0.0
        %1193 = vmatprep.subr.mxu0 0.0
        %1194 = vmatpush2.xpose.msra.mxu0 0.0
        %1195 = vmatprep.subr.mxu0 0.0
        %1196 = vmatpush2.xpose.msra.mxu0 0.0
        %1197 = vmatprep.subr.mxu0 0.0
        %1198 = vmatpush2.xpose.msra.mxu0 0.0
        %1199 = vmatprep.subr.mxu0 0.0
        %1200 = vmatpush2.xpose.msra.mxu0 0.0
        %1201 = vmatprep.subr.mxu0 0.0
        %1202 = vmatpush2.xpose.msra.mxu0 0.0
        %1203 = vmatprep.subr.mxu0 0.0
        %1204 = vmatpush2.xpose.msra.mxu0 0.0
        %1205 = vmatprep.subr.mxu0 0.0
        %1206 = vmatpush2.xpose.msra.mxu0 0.0
        %1207 = vmatprep.subr.mxu0 0.0
        %1208 = vmatpush2.xpose.msra.mxu0 0.0
        %1209 = vmatprep.mubr.f32.mxu0 0.0
        %1210 = vmatmul.mubr.f32.gmra.mxu0 %v1141
        %v1211 = vpop.f32.mrf.mxu0
        %v1212 = vadd.f32 0.0, %v1211
        %v1213 = vpop.f32.mrf.mxu0
        %1214 = vdwg.mxu0
        %v1215 = vsel %vm1052, %v1212, -inf
        %1216 = vmax.xlane.f32.xlu0 %v1215
        %v1217 = vpop.xlane.xlu0 %1216
        %v1218 = vsub.f32 %v1212, %v1217
        %v1219 = vmul.f32 %v1218, 1.442695
        %v1220 = vpow.pop %v1219
        %v1221 = vsel %vm1052, %v1220, 0.0
        %1222 = vadd.xlane.f32.xlu0 %v1221
        %v1223 = vpop.xlane.xlu0 %1222
        %1225 = vrot.lane.b32.xlu0 %v970, 112
        %v1226 = vpop.permute.xlu0 %1225
        %v1229 = vsel %vm1052, %v1220, 0
        %1231 = vmatprep.subr.mxu0 0.0
        %1232 = vmatpush1.msra.mxu0 0.0
        %1233 = vmatprep.subr.mxu0 0.0
        %1234 = vmatpush1.msra.mxu0 0.0
        %1235 = vmatprep.subr.mxu0 0.0
        %1236 = vmatpush1.msra.mxu0 0.0
        %1237 = vmatprep.subr.mxu0 0.0
        %1238 = vmatpush1.msra.mxu0 0.0
        %1239 = vmatprep.subr.mxu0 0.0
        %1240 = vmatpush1.msra.mxu0 0.0
        %1241 = vmatprep.subr.mxu0 0.0
        %1242 = vmatpush1.msra.mxu0 0.0
        %1243 = vmatprep.subr.mxu0 0.0
        %1244 = vmatpush1.msra.mxu0 0.0
        %1245 = vmatprep.subr.mxu0 0.0
        %1246 = vmatpush1.msra.mxu0 0.0
        %1247 = vmatprep.subr.mxu0 0.0
        %1248 = vmatpush1.msra.mxu0 0.0
        %1249 = vmatprep.subr.mxu0 0.0
        %1250 = vmatpush1.msra.mxu0 0.0
        %1251 = vmatprep.subr.mxu0 0.0
        %1252 = vmatpush1.msra.mxu0 0.0
        %1253 = vmatprep.subr.mxu0 0.0
        %1254 = vmatpush1.msra.mxu0 0.0
        %1255 = vmatprep.subr.mxu0 0.0
        %1256 = vmatpush1.msra.mxu0 0.0
        %1257 = vmatprep.subr.mxu0 0.0
        %1258 = vmatpush1.msra.mxu0 0.0
        %1259 = vmatprep.subr.mxu0 0.0
        %1260 = vmatpush1.msra.mxu0 0.0
        %1261 = vmatprep.subr.mxu0 0.0
        %1262 = vmatpush1.msra.mxu0 %v1226
        %1263 = vmatprep.subr.mxu0 0.0
        %1264 = vmatpush2.msra.mxu0 0.0
        %1265 = vmatprep.subr.mxu0 0.0
        %1266 = vmatpush2.msra.mxu0 0.0
        %1267 = vmatprep.subr.mxu0 0.0
        %1268 = vmatpush2.msra.mxu0 0.0
        %1269 = vmatprep.subr.mxu0 0.0
        %1270 = vmatpush2.msra.mxu0 0.0
        %1271 = vmatprep.subr.mxu0 0.0
        %1272 = vmatpush2.msra.mxu0 0.0
        %1273 = vmatprep.subr.mxu0 0.0
        %1274 = vmatpush2.msra.mxu0 0.0
        %1275 = vmatprep.subr.mxu0 0.0
        %1276 = vmatpush2.msra.mxu0 0.0
        %1277 = vmatprep.subr.mxu0 0.0
        %1278 = vmatpush2.msra.mxu0 0.0
        %1279 = vmatprep.subr.mxu0 0.0
        %1280 = vmatpush2.msra.mxu0 0.0
        %1281 = vmatprep.subr.mxu0 0.0
        %1282 = vmatpush2.msra.mxu0 0.0
        %1283 = vmatprep.subr.mxu0 0.0
        %1284 = vmatpush2.msra.mxu0 0.0
        %1285 = vmatprep.subr.mxu0 0.0
        %1286 = vmatpush2.msra.mxu0 0.0
        %1287 = vmatprep.subr.mxu0 0.0
        %1288 = vmatpush2.msra.mxu0 0.0
        %1289 = vmatprep.subr.mxu0 0.0
        %1290 = vmatpush2.msra.mxu0 0.0
        %1291 = vmatprep.subr.mxu0 0.0
        %1292 = vmatpush2.msra.mxu0 0.0
        %1293 = vmatprep.subr.mxu0 0.0
        %1294 = vmatpush2.msra.mxu0 0.0
        %1295 = vmatprep.mubr.f32.mxu0 0.0
        %1296 = vmatmul.mubr.f32.gmra.mxu0 %v1229
        %v1297 = vpop.f32.mrf.mxu0
        %v1298 = vadd.f32 0.0, %v1297
        %v1299 = vpop.f32.mrf.mxu0
        %1300 = vdwg.mxu0
        %v1301 = vrcp.pop %v1223
        %v1302 = vmul.f32 %v1298, %v1301
        %v1304 = vsel %vm975, %v1302, 0
        %1306 = vmatprep.subr.mxu0 0.0
        %1307 = vmatpush1.msra.mxu0 0.0
        %1308 = vmatprep.subr.mxu0 0.0
        %1309 = vmatpush1.msra.mxu0 0.0
        %1310 = vmatprep.subr.mxu0 0.0
        %1311 = vmatpush1.msra.mxu0 0.0
        %1312 = vmatprep.subr.mxu0 0.0
        %1313 = vmatpush1.msra.mxu0 0.0
        %1314 = vmatprep.subr.mxu0 0.0
        %1315 = vmatpush1.msra.mxu0 0.0
        %1316 = vmatprep.subr.mxu0 0.0
        %1317 = vmatpush1.msra.mxu0 0.0
        %1318 = vmatprep.subr.mxu0 0.0
        %1319 = vmatpush1.msra.mxu0 0.0
        %1320 = vmatprep.subr.mxu0 0.0
        %1321 = vmatpush1.msra.mxu0 0.0
        %1322 = vmatprep.subr.mxu0 0.0
        %1323 = vmatpush1.msra.mxu0 0.0
        %1324 = vmatprep.subr.mxu0 0.0
        %1325 = vmatpush1.msra.mxu0 0.0
        %1326 = vmatprep.subr.mxu0 0.0
        %1327 = vmatpush1.msra.mxu0 0.0
        %1328 = vmatprep.subr.mxu0 0.0
        %1329 = vmatpush1.msra.mxu0 0.0
        %1330 = vmatprep.subr.mxu0 0.0
        %1331 = vmatpush1.msra.mxu0 0.0
        %1332 = vmatprep.subr.mxu0 0.0
        %1333 = vmatpush1.msra.mxu0 0.0
        %1334 = vmatprep.subr.mxu0 0.0
        %1335 = vmatpush1.msra.mxu0 %v974
        %1336 = vmatprep.subr.mxu0 0.0
        %1337 = vmatpush1.msra.mxu0 %v973
        %1338 = vmatprep.subr.mxu0 0.0
        %1339 = vmatpush2.msra.mxu0 0.0
        %1340 = vmatprep.subr.mxu0 0.0
        %1341 = vmatpush2.msra.mxu0 0.0
        %1342 = vmatprep.subr.mxu0 0.0
        %1343 = vmatpush2.msra.mxu0 0.0
        %1344 = vmatprep.subr.mxu0 0.0
        %1345 = vmatpush2.msra.mxu0 0.0
        %1346 = vmatprep.subr.mxu0 0.0
        %1347 = vmatpush2.msra.mxu0 0.0
        %1348 = vmatprep.subr.mxu0 0.0
        %1349 = vmatpush2.msra.mxu0 0.0
        %1350 = vmatprep.subr.mxu0 0.0
        %1351 = vmatpush2.msra.mxu0 0.0
        %1352 = vmatprep.subr.mxu0 0.0
        %1353 = vmatpush2.msra.mxu0 0.0
        %1354 = vmatprep.subr.mxu0 0.0
        %1355 = vmatpush2.msra.mxu0 0.0
        %1356 = vmatprep.subr.mxu0 0.0
        %1357 = vmatpush2.msra.mxu0 0.0
        %1358 = vmatprep.subr.mxu0 0.0
        %1359 = vmatpush2.msra.mxu0 0.0
        %1360 = vmatprep.subr.mxu0 0.0
        %1361 = vmatpush2.msra.mxu0 0.0
        %1362 = vmatprep.subr.mxu0 0.0
        %1363 = vmatpush2.msra.mxu0 0.0
        %1364 = vmatprep.subr.mxu0 0.0
        %1365 = vmatpush2.msra.mxu0 0.0
        %1366 = vmatprep.subr.mxu0 0.0
        %1367 = vmatpush2.msra.mxu0 0.0
        %1368 = vmatprep.subr.mxu0 0.0
        %1369 = vmatpush2.msra.mxu0 0.0
        %1370 = vmatprep.mubr.f32.mxu0 0.0
        %1371 = vmatmul.mubr.f32.gmra.mxu0 %v1304
        %v1372 = vpop.f32.mrf.mxu0
        %v1373 = vadd.f32 0.0, %v1372
        %v1374 = vpop.f32.mrf.mxu0
        %1375 = vdwg.mxu0
        %v1377 = vsel %vm975, %v1136, 0
        %1379 = vmatprep.subr.mxu0 0.0
        %1380 = vmatpush1.msra.mxu0 0.0
        %1381 = vmatprep.subr.mxu0 0.0
        %1382 = vmatpush1.msra.mxu0 0.0
        %1383 = vmatprep.subr.mxu0 0.0
        %1384 = vmatpush1.msra.mxu0 0.0
        %1385 = vmatprep.subr.mxu0 0.0
        %1386 = vmatpush1.msra.mxu0 0.0
        %1387 = vmatprep.subr.mxu0 0.0
        %1388 = vmatpush1.msra.mxu0 0.0
        %1389 = vmatprep.subr.mxu0 0.0
        %1390 = vmatpush1.msra.mxu0 0.0
        %1391 = vmatprep.subr.mxu0 0.0
        %1392 = vmatpush1.msra.mxu0 0.0
        %1393 = vmatprep.subr.mxu0 0.0
        %1394 = vmatpush1.msra.mxu0 0.0
        %1395 = vmatprep.subr.mxu0 0.0
        %1396 = vmatpush1.msra.mxu0 0.0
        %1397 = vmatprep.subr.mxu0 0.0
        %1398 = vmatpush1.msra.mxu0 0.0
        %1399 = vmatprep.subr.mxu0 0.0
        %1400 = vmatpush1.msra.mxu0 0.0
        %1401 = vmatprep.subr.mxu0 0.0
        %1402 = vmatpush1.msra.mxu0 0.0
        %1403 = vmatprep.subr.mxu0 0.0
        %1404 = vmatpush1.msra.mxu0 0.0
        %1405 = vmatprep.subr.mxu0 0.0
        %1406 = vmatpush1.msra.mxu0 0.0
        %1407 = vmatprep.subr.mxu0 0.0
        %1408 = vmatpush1.msra.mxu0 %v972
        %1409 = vmatprep.subr.mxu0 0.0
        %1410 = vmatpush1.msra.mxu0 %v971
        %1411 = vmatprep.subr.mxu0 0.0
        %1412 = vmatpush2.msra.mxu0 0.0
        %1413 = vmatprep.subr.mxu0 0.0
        %1414 = vmatpush2.msra.mxu0 0.0
        %1415 = vmatprep.subr.mxu0 0.0
        %1416 = vmatpush2.msra.mxu0 0.0
        %1417 = vmatprep.subr.mxu0 0.0
        %1418 = vmatpush2.msra.mxu0 0.0
        %1419 = vmatprep.subr.mxu0 0.0
        %1420 = vmatpush2.msra.mxu0 0.0
        %1421 = vmatprep.subr.mxu0 0.0
        %1422 = vmatpush2.msra.mxu0 0.0
        %1423 = vmatprep.subr.mxu0 0.0
        %1424 = vmatpush2.msra.mxu0 0.0
        %1425 = vmatprep.subr.mxu0 0.0
        %1426 = vmatpush2.msra.mxu0 0.0
        %1427 = vmatprep.subr.mxu0 0.0
        %1428 = vmatpush2.msra.mxu0 0.0
        %1429 = vmatprep.subr.mxu0 0.0
        %1430 = vmatpush2.msra.mxu0 0.0
        %1431 = vmatprep.subr.mxu0 0.0
        %1432 = vmatpush2.msra.mxu0 0.0
        %1433 = vmatprep.subr.mxu0 0.0
        %1434 = vmatpush2.msra.mxu0 0.0
        %1435 = vmatprep.subr.mxu0 0.0
        %1436 = vmatpush2.msra.mxu0 0.0
        %1437 = vmatprep.subr.mxu0 0.0
        %1438 = vmatpush2.msra.mxu0 0.0
        %1439 = vmatprep.subr.mxu0 0.0
        %1440 = vmatpush2.msra.mxu0 0.0
        %1441 = vmatprep.subr.mxu0 0.0
        %1442 = vmatpush2.msra.mxu0 0.0
        %1443 = vmatprep.mubr.f32.mxu0 0.0
        %1444 = vmatmul.mubr.f32.gmra.mxu0 %v1377
        %v1445 = vpop.f32.mrf.mxu0
        %v1446 = vadd.f32 %v1373, %v1445
        %v1447 = vpop.f32.mrf.mxu0
        %1448 = vdwg.mxu0
        %v1449 = vld [vmem:[%s10] sm:$0x1]
        %v1451 = vlaneseq
        %v1452 = vshrl.u32 %v1451, 7
        %v1453 = vsub.s32 0, %v1452
        %v1454 = vrot.slane %v1449, %v1453
        %v1456 = vadd.f32 %v1446, %v1454
        %v1457 = vadd.f32 %v1456, %v883
        %v1458 = vld [vmem:[%s11] sm:$0x1]
        %v1459 = vld [vmem:[%s12] sm:$0x1]
        %v1460 = vsel %vm895, %v1457, 0.0
        %1461 = vadd.xlane.f32.xlu0 %v1460
        %v1462 = vpop.xlane.xlu0 %1461
        %v1463 = vrcp.pop 32.0
        %v1464 = vmul.f32 %v1462, %v1463
        %v1465 = vsub.f32 %v1457, %v1464
        %v1466 = vmul.f32 %v1465, %v1465
        %v1467 = vsel %vm895, %v1466, 0.0
        %1468 = vadd.xlane.f32.xlu0 %v1467
        %v1469 = vpop.xlane.xlu0 %1468
        %v1470 = vmul.f32 %v1469, %v1463
        %v1471 = vadd.f32 %v1470, 1e-05
        %v1472 = vrsqrt.pop %v1471
        %v1473 = vmul.f32 %v1465, %v1472
        %v1475 = vlaneseq
        %v1476 = vshrl.u32 %v1475, 7
        %v1477 = vsub.s32 0, %v1476
        %v1478 = vrot.slane %v1458, %v1477
        %v1480 = vmul.f32 %v1473, %v1478
        %v1482 = vlaneseq
        %v1483 = vshrl.u32 %v1482, 7
        %v1484 = vsub.s32 0, %v1483
        %v1485 = vrot.slane %v1459, %v1484
        %v1487 = vadd.f32 %v1480, %v1485
        %v1488 = vld [vmem:[%s13] sm:$0xff]
        %v1489 = vld [vmem:[%s13 + $0x8] sm:$0xff]
        %v1490 = vld [vmem:[%s13 + $0x10] sm:$0xff]
        %v1491 = vld [vmem:[%s13 + $0x18] sm:$0xff]
        %v1492 = vld [vmem:[%s14] sm:$0x1]
        %v1494 = vlaneseq
        %v1495 = vshrl.u32 %v1494, 7
        %v1496 = vsub.s32 0, %v1495
        %v1497 = vrot.slane %v1492, %v1496
        %v1500 = vsel %vm895, %v1487, 0
        %1502 = vmatprep.subr.mxu0 0.0
        %1503 = vmatpush1.msra.mxu0 0.0
        %1504 = vmatprep.subr.mxu0 0.0
        %1505 = vmatpush1.msra.mxu0 0.0
        %1506 = vmatprep.subr.mxu0 0.0
        %1507 = vmatpush1.msra.mxu0 0.0
        %1508 = vmatprep.subr.mxu0 0.0
        %1509 = vmatpush1.msra.mxu0 0.0
        %1510 = vmatprep.subr.mxu0 0.0
        %1511 = vmatpush1.msra.mxu0 0.0
        %1512 = vmatprep.subr.mxu0 0.0
        %1513 = vmatpush1.msra.mxu0 0.0
        %1514 = vmatprep.subr.mxu0 0.0
        %1515 = vmatpush1.msra.mxu0 0.0
        %1516 = vmatprep.subr.mxu0 0.0
        %1517 = vmatpush1.msra.mxu0 0.0
        %1518 = vmatprep.subr.mxu0 0.0
        %1519 = vmatpush1.msra.mxu0 0.0
        %1520 = vmatprep.subr.mxu0 0.0
        %1521 = vmatpush1.msra.mxu0 0.0
        %1522 = vmatprep.subr.mxu0 0.0
        %1523 = vmatpush1.msra.mxu0 0.0
        %1524 = vmatprep.subr.mxu0 0.0
        %1525 = vmatpush1.msra.mxu0 0.0
        %1526 = vmatprep.subr.mxu0 0.0
        %1527 = vmatpush1.msra.mxu0 %v1491
        %1528 = vmatprep.subr.mxu0 0.0
        %1529 = vmatpush1.msra.mxu0 %v1490
        %1530 = vmatprep.subr.mxu0 0.0
        %1531 = vmatpush1.msra.mxu0 %v1489
        %1532 = vmatprep.subr.mxu0 0.0
        %1533 = vmatpush1.msra.mxu0 %v1488
        %1534 = vmatprep.subr.mxu0 0.0
        %1535 = vmatpush2.msra.mxu0 0.0
        %1536 = vmatprep.subr.mxu0 0.0
        %1537 = vmatpush2.msra.mxu0 0.0
        %1538 = vmatprep.subr.mxu0 0.0
        %1539 = vmatpush2.msra.mxu0 0.0
        %1540 = vmatprep.subr.mxu0 0.0
        %1541 = vmatpush2.msra.mxu0 0.0
        %1542 = vmatprep.subr.mxu0 0.0
        %1543 = vmatpush2.msra.mxu0 0.0
        %1544 = vmatprep.subr.mxu0 0.0
        %1545 = vmatpush2.msra.mxu0 0.0
        %1546 = vmatprep.subr.mxu0 0.0
        %1547 = vmatpush2.msra.mxu0 0.0
        %1548 = vmatprep.subr.mxu0 0.0
        %1549 = vmatpush2.msra.mxu0 0.0
        %1550 = vmatprep.subr.mxu0 0.0
        %1551 = vmatpush2.msra.mxu0 0.0
        %1552 = vmatprep.subr.mxu0 0.0
        %1553 = vmatpush2.msra.mxu0 0.0
        %1554 = vmatprep.subr.mxu0 0.0
        %1555 = vmatpush2.msra.mxu0 0.0
        %1556 = vmatprep.subr.mxu0 0.0
        %1557 = vmatpush2.msra.mxu0 0.0
        %1558 = vmatprep.subr.mxu0 0.0
        %1559 = vmatpush2.msra.mxu0 0.0
        %1560 = vmatprep.subr.mxu0 0.0
        %1561 = vmatpush2.msra.mxu0 0.0
        %1562 = vmatprep.subr.mxu0 0.0
        %1563 = vmatpush2.msra.mxu0 0.0
        %1564 = vmatprep.subr.mxu0 0.0
        %1565 = vmatpush2.msra.mxu0 0.0
        %1566 = vmatprep.mubr.f32.mxu0 0.0
        %1567 = vmatmul.mubr.f32.gmra.mxu0 %v1500
        %v1568 = vpop.f32.mrf.mxu0
        %v1569 = vadd.f32 %v1497, %v1568
        %v1570 = vpop.f32.mrf.mxu0
        %1571 = vdwg.mxu0
        %vm1572 = vcmp.ge.f32.partialorder %v1569, 0.0
        %v1573 = vmul.f32 %v1569, 0.01
        %v1574 = vsel %vm1572, %v1569, %v1573
        %v1575 = vld [vmem:[%s15] sm:$0xff]
        %v1576 = vld [vmem:[%s15 + $0x8] sm:$0xff]
        %v1577 = vld [vmem:[%s15 + $0x10] sm:$0xff]
        %v1578 = vld [vmem:[%s15 + $0x18] sm:$0xff]
        %v1579 = vld [vmem:[%s15 + $0x20] sm:$0xff]
        %v1580 = vld [vmem:[%s15 + $0x28] sm:$0xff]
        %v1581 = vld [vmem:[%s15 + $0x30] sm:$0xff]
        %v1582 = vld [vmem:[%s15 + $0x38] sm:$0xff]
        %v1583 = vld [vmem:[%s15 + $0x40] sm:$0xff]
        %v1584 = vld [vmem:[%s15 + $0x48] sm:$0xff]
        %v1585 = vld [vmem:[%s15 + $0x50] sm:$0xff]
        %v1586 = vld [vmem:[%s15 + $0x58] sm:$0xff]
        %v1587 = vld [vmem:[%s15 + $0x60] sm:$0xff]
        %v1588 = vld [vmem:[%s15 + $0x68] sm:$0xff]
        %v1589 = vld [vmem:[%s15 + $0x70] sm:$0xff]
        %v1590 = vld [vmem:[%s15 + $0x78] sm:$0xff]
        %v1591 = vld [vmem:[%s16] sm:$0x1]
        %v1593 = vlaneseq
        %v1594 = vshrl.u32 %v1593, 7
        %v1595 = vsub.s32 0, %v1594
        %v1596 = vrot.slane %v1591, %v1595
        %1598 = vmatprep.subr.mxu0 0.0
        %1599 = vmatpush1.msra.mxu0 %v1590
        %1600 = vmatprep.subr.mxu0 0.0
        %1601 = vmatpush1.msra.mxu0 %v1589
        %1602 = vmatprep.subr.mxu0 0.0
        %1603 = vmatpush1.msra.mxu0 %v1588
        %1604 = vmatprep.subr.mxu0 0.0
        %1605 = vmatpush1.msra.mxu0 %v1587
        %1606 = vmatprep.subr.mxu0 0.0
        %1607 = vmatpush1.msra.mxu0 %v1586
        %1608 = vmatprep.subr.mxu0 0.0
        %1609 = vmatpush1.msra.mxu0 %v1585
        %1610 = vmatprep.subr.mxu0 0.0
        %1611 = vmatpush1.msra.mxu0 %v1584
        %1612 = vmatprep.subr.mxu0 0.0
        %1613 = vmatpush1.msra.mxu0 %v1583
        %1614 = vmatprep.subr.mxu0 0.0
        %1615 = vmatpush1.msra.mxu0 %v1582
        %1616 = vmatprep.subr.mxu0 0.0
        %1617 = vmatpush1.msra.mxu0 %v1581
        %1618 = vmatprep.subr.mxu0 0.0
        %1619 = vmatpush1.msra.mxu0 %v1580
        %1620 = vmatprep.subr.mxu0 0.0
        %1621 = vmatpush1.msra.mxu0 %v1579
        %1622 = vmatprep.subr.mxu0 0.0
        %1623 = vmatpush1.msra.mxu0 %v1578
        %1624 = vmatprep.subr.mxu0 0.0
        %1625 = vmatpush1.msra.mxu0 %v1577
        %1626 = vmatprep.subr.mxu0 0.0
        %1627 = vmatpush1.msra.mxu0 %v1576
        %1628 = vmatprep.subr.mxu0 0.0
        %1629 = vmatpush1.msra.mxu0 %v1575
        %1630 = vmatprep.subr.mxu0 0.0
        %1631 = vmatpush2.msra.mxu0 0.0
        %1632 = vmatprep.subr.mxu0 0.0
        %1633 = vmatpush2.msra.mxu0 0.0
        %1634 = vmatprep.subr.mxu0 0.0
        %1635 = vmatpush2.msra.mxu0 0.0
        %1636 = vmatprep.subr.mxu0 0.0
        %1637 = vmatpush2.msra.mxu0 0.0
        %1638 = vmatprep.subr.mxu0 0.0
        %1639 = vmatpush2.msra.mxu0 0.0
        %1640 = vmatprep.subr.mxu0 0.0
        %1641 = vmatpush2.msra.mxu0 0.0
        %1642 = vmatprep.subr.mxu0 0.0
        %1643 = vmatpush2.msra.mxu0 0.0
        %1644 = vmatprep.subr.mxu0 0.0
        %1645 = vmatpush2.msra.mxu0 0.0
        %1646 = vmatprep.subr.mxu0 0.0
        %1647 = vmatpush2.msra.mxu0 0.0
        %1648 = vmatprep.subr.mxu0 0.0
        %1649 = vmatpush2.msra.mxu0 0.0
        %1650 = vmatprep.subr.mxu0 0.0
        %1651 = vmatpush2.msra.mxu0 0.0
        %1652 = vmatprep.subr.mxu0 0.0
        %1653 = vmatpush2.msra.mxu0 0.0
        %1654 = vmatprep.subr.mxu0 0.0
        %1655 = vmatpush2.msra.mxu0 0.0
        %1656 = vmatprep.subr.mxu0 0.0
        %1657 = vmatpush2.msra.mxu0 0.0
        %1658 = vmatprep.subr.mxu0 0.0
        %1659 = vmatpush2.msra.mxu0 0.0
        %1660 = vmatprep.subr.mxu0 0.0
        %1661 = vmatpush2.msra.mxu0 0.0
        %1662 = vmatprep.mubr.f32.mxu0 0.0
        %1663 = vmatmul.mubr.f32.gmra.mxu0 %v1574
        %v1664 = vpop.f32.mrf.mxu0
        %v1665 = vadd.f32 %v1596, %v1664
        %v1666 = vpop.f32.mrf.mxu0
        %1667 = vdwg.mxu0
        %vm1668 = vcmp.ge.f32.partialorder %v1665, 0.0
        %v1669 = vmul.f32 %v1665, 0.01
        %v1670 = vsel %vm1668, %v1665, %v1669
        %v1671 = vadd.f32 %v1670, %v1487
        %v1672 = vld [vmem:[%s17] sm:$0x1]
        %v1673 = vld [vmem:[%s18] sm:$0x1]
        %v1674 = vsel %vm895, %v1671, 0.0
        %1675 = vadd.xlane.f32.xlu0 %v1674
        %v1676 = vpop.xlane.xlu0 %1675
        %v1677 = vmul.f32 %v1676, %v1463
        %v1678 = vsub.f32 %v1671, %v1677
        %v1679 = vmul.f32 %v1678, %v1678
        %v1680 = vsel %vm895, %v1679, 0.0
        %1681 = vadd.xlane.f32.xlu0 %v1680
        %v1682 = vpop.xlane.xlu0 %1681
        %v1683 = vmul.f32 %v1682, %v1463
        %v1684 = vadd.f32 %v1683, 1e-05
        %v1685 = vrsqrt.pop %v1684
        %v1686 = vmul.f32 %v1678, %v1685
        %v1688 = vlaneseq
        %v1689 = vshrl.u32 %v1688, 7
        %v1690 = vsub.s32 0, %v1689
        %v1691 = vrot.slane %v1672, %v1690
        %v1693 = vmul.f32 %v1686, %v1691
        %v1695 = vlaneseq
        %v1696 = vshrl.u32 %v1695, 7
        %v1697 = vsub.s32 0, %v1696
        %v1698 = vrot.slane %v1673, %v1697
        %v1700 = vadd.f32 %v1693, %v1698
        %1701 = vst.msk [vmem:[%s705] sm:$0xff] %vm895, %v1700
        %s1702 = sand.u32 %s477, 1
        %s1703 = scalar_lea.sflag [#allocation6], %s1702
        %s1704 = sand.u32 %s477, 1
        %s1705 = smul.addr %s1704, 8
        %s1706 = scalar_lea.vmem [#allocation10], %s1705
        // Predicated region
        $region113: #{tpu_custom_call.1} parent=95 // pred_check
          %p1707 = pneg %p487
        $region114: #{tpu_custom_call.1} parent=95 // pred_check_branch
          %1709 = sbr.rel (%p1707) target = $region116
        $region115: #{tpu_custom_call.1} parent=95 // pred_region
          %s1711 = ssub.s32 128, 128
          %1712 = vsyncadd %s1703, %s1711
          %s1713 = sadd.s32 %s44, %s43
          %s1714 = smul.addr %s1713, 128
          %s1715 = scalar_lea.hbm %s19, %s1714
          %s1717 = sshll.u32 %s1706, 4
          %s1718 = int_to_ptr.vmem [resolvable:$true] %s1717
          %1720 = dma.vmem_to_hbm [thread:$0]  %s1718, 128, %s1715, %s1703
        $region116: #{tpu_custom_call.1} parent=95 // pred_fallthru
          _
      $region96: #{tpu_custom_call.1} parent=5 // pred_fallthru
        _
      %p1721 = scmp.le.s32.totalorder 2, %s34
      // Predicated region
      $region117: #{tpu_custom_call.1} parent=5 // pred_check
        %p1722 = pneg %p1721
      $region118: #{tpu_custom_call.1} parent=5 // pred_check_branch
        %1724 = sbr.rel (%p1722) target = $region120
      $region119: #{tpu_custom_call.1} parent=5 // pred_region
        %s1725 = ssub.s32 %s34, 2
        // Predicated region
        $region121: #{tpu_custom_call.1} parent=119 // pred_check
          %p1726 = pneg %p493
        $region122: #{tpu_custom_call.1} parent=119 // pred_check_branch
          %1728 = sbr.rel (%p1726) target = $region124
        $region123: #{tpu_custom_call.1} parent=119 // pred_region
          %s1729 = sand.u32 %s478, 1
          %s1730 = scalar_lea.sflag [#allocation6], %s1729
          %s1731 = sand.u32 %s478, 1
          %s1732 = smul.addr %s1731, 8
          %s1733 = scalar_lea.vmem [#allocation10], %s1732
          %1734 = dma.done %s1730, 128
        $region124: #{tpu_custom_call.1} parent=119 // pred_fallthru
          _
      $region120: #{tpu_custom_call.1} parent=5 // pred_fallthru
        _
    $region6: #{tpu_custom_call.1} parent=1 // loop_footer
      %s38 = sadd.s32 1, %s34
    $region7: #{tpu_custom_call.1} parent=1 // loop_footer_branch
      %33 = sbr.rel target = $region3
    $region8: #{tpu_custom_call.1} parent=1 // loop_exit
      _
    %1735 = vsyncpa [#allocation5], 1
    %s1736 = scalar_lea.sflag [#allocation5], 1
    %1737 = vsyncpa %s1736, 1
    %1738 = vsyncpa [#allocation8], 1
    %s1739 = scalar_lea.sflag [#allocation8], 1
    %1740 = vsyncpa %s1739, 1
    %1741 = vsyncpa [#allocation6], 1
    %s1742 = scalar_lea.sflag [#allocation6], 1
    %1743 = vsyncpa %s1742, 1

</llo_original>
